<compile_context>
chip_gen: v7x
topology: tpu7x:2x2x1
jax: 0.10.0
libtpu: 0.0.40
codegen_flags: <defaults>
</compile_context>

<pallas_src>
import math
import functools

import jax
import jax.numpy as jnp
from jax.experimental import pallas as pl
from jax.experimental.pallas import tpu as pltpu


# ---------------------------------------------------------------------------
# Kernels
# ---------------------------------------------------------------------------

def _attention_core(q, k, v, *, heads, d_k, bt, S):
    """Scaled dot-product attention over all heads at once.

    q/k/v: (bt*S, heads*d_k) f32 projected activations.
    Returns ctx: (bt*S, heads*d_k) with the same head-major lane layout as the
    PyTorch transpose(1,2).contiguous().view(B, -1, heads*d_k).
    """
    rows = bt * S

    def split(x):
        # (rows, H) -> (bt*heads, S, d_k): one relayout per tensor instead of
        # `heads` lane-subrange extracts; single merged batch axis keeps the
        # einsum a plain 1-batch-dim dot_general for Mosaic.
        return (x.reshape(bt, S, heads, d_k)
                 .transpose(0, 2, 1, 3)
                 .reshape(bt * heads, S, d_k))

    qh, kh, vh = split(q), split(k), split(v)

    s = jnp.einsum("bqd,bkd->bqk", qh, kh,
                   preferred_element_type=jnp.float32) * (1.0 / math.sqrt(d_k))
    s = jnp.clip(s, -30.0, 30.0) + 1e-5          # clamp then += 1e-5 (module order)

    # Scores are clamped to [-30, 30], so exp is safe in f32 without
    # max-subtraction; denominator via EUP approximate reciprocal.
    p = jnp.exp(s)
    p = p * pl.reciprocal(jnp.sum(p, axis=-1, keepdims=True), approx=True)

    ctx = jnp.einsum("bqk,bkd->bqd", p, vh,
                     preferred_element_type=jnp.float32)       # (bt*heads, S, d_k)
    return (ctx.reshape(bt, heads, S, d_k)
               .transpose(0, 2, 1, 3)
               .reshape(rows, heads * d_k))


def _mha_kernel(q_ref, k_ref, v_ref, wqkv_ref, b_ref, wo_ref, o_ref,
                *, heads, d_k, bt, S, H):
    """General (cross-attention) path.  One grid step = `bt` batch elements.

    q_ref/k_ref/v_ref : (bt, S, H)
    wqkv_ref          : (3, H, H)   stacked Wq^T / Wk^T / Wv^T
    b_ref             : (4, H)      stacked bq / bk / bv / bo
    wo_ref            : (H, H)      Wo^T
    o_ref             : (bt, S, H)
    """
    rows = bt * S
    xq = q_ref[...].reshape(rows, H)
    xk = k_ref[...].reshape(rows, H)
    xv = v_ref[...].reshape(rows, H)
    b = b_ref[...]                                             # (4, H)

    # Input projections; stacked weight selected by free leading-dim index.
    q = jnp.dot(xq, wqkv_ref[0], preferred_element_type=jnp.float32) + b[0:1, :]
    k = jnp.dot(xk, wqkv_ref[1], preferred_element_type=jnp.float32) + b[1:2, :]
    v = jnp.dot(xv, wqkv_ref[2], preferred_element_type=jnp.float32) + b[2:3, :]

    ctx = _attention_core(q, k, v, heads=heads, d_k=d_k, bt=bt, S=S)

    # Output projection: single K=H matmul (no per-head K=d_k accumulation).
    out = jnp.dot(ctx, wo_ref[...], preferred_element_type=jnp.float32) + b[3:4, :]
    o_ref[...] = jnp.maximum(out, 0.0).reshape(bt, S, H).astype(o_ref.dtype)


def _mha_self_kernel(x_ref, wqkv_ref, bqkv_ref, wo_ref, bo_ref, o_ref,
                     *, heads, d_k, bt, S, H):
    """Self-attention fast path (query is key is value).

    x_ref     : (bt, S, H)   single DMA'd input stream
    wqkv_ref  : (H, 3H)      [Wq^T | Wk^T | Wv^T]
    bqkv_ref  : (1, 3H)      [bq | bk | bv]
    wo_ref    : (H, H)
    bo_ref    : (1, H)
    """
    rows = bt * S
    x = x_ref[...].reshape(rows, H)

    # One fused projection matmul (N=3H) instead of three N=H matmuls.
    qkv = jnp.dot(x, wqkv_ref[...], preferred_element_type=jnp.float32) + bqkv_ref[...]
    q = qkv[:, 0:H]
    k = qkv[:, H:2 * H]
    v = qkv[:, 2 * H:3 * H]

    ctx = _attention_core(q, k, v, heads=heads, d_k=d_k, bt=bt, S=S)

    out = jnp.dot(ctx, wo_ref[...], preferred_element_type=jnp.float32) + bo_ref[...]
    o_ref[...] = jnp.maximum(out, 0.0).reshape(bt, S, H).astype(o_ref.dtype)


# ---------------------------------------------------------------------------
# Wrapper
# ---------------------------------------------------------------------------

def _tensorcores_per_device():
    """How many TensorCores a 'parallel' grid axis can shard over on this
    device (2 on multi-TC chips such as v7x, else 1).  Falls back to 1 if the
    device does not expose a core count -- extra grid shards on a 1-TC chip
    are pure serial overhead, so 1 is the safe default."""
    try:
        d = jax.devices()[0]
        n = getattr(d, "num_cores", None)
        if isinstance(n, int) and n >= 1:
            return min(int(n), 2)
    except Exception:
        pass
    return 1


def _pick_batch_tile(B, S, *, n_shards, max_rows=1024):
    """Largest divisor of B that still yields >= n_shards grid steps (one per
    TensorCore) and keeps <= max_rows fused rows per step.  The row cap bounds
    vreg/VMEM pressure: with H=32 every 8 rows of a (rows, H) f32 intermediate
    occupies a whole vreg (only 32/128 lanes filled)."""
    best = 1
    for bt in range(1, B + 1):
        if B % bt:
            continue
        if B // bt < n_shards:
            continue
        if bt * S > max_rows:
            continue
        best = bt
    return best


def pack_params(params):
    """Pre-pack weights/biases ONCE (outside the per-call path) into the
    operands the kernels consume.  Call this when parameters are created, not
    on every forward call."""
    return {
        # general path
        "wqkv": jnp.stack([params["wq_t"], params["wk_t"], params["wv_t"]], axis=0),       # (3,H,H)
        "b4": jnp.stack([params["bq"], params["bk"], params["bv"], params["bo"]], axis=0),  # (4,H)
        "wo": params["wo_t"],                                                               # (H,H)
        # self-attention fast path
        "wqkv_cat": jnp.concatenate([params["wq_t"], params["wk_t"], params["wv_t"]], axis=1),  # (H,3H)
        "bqkv_cat": jnp.concatenate([params["bq"], params["bk"], params["bv"]])[None, :],       # (1,3H)
        "bo": params["bo"][None, :],                                                            # (1,H)
    }


def multi_headed_attention(query, key, value, packed, *, heads, batch_tile=None):
    """query/key/value: (B, S, H) float32.  packed: output of pack_params()."""
    B, S, H = query.shape
    assert H % heads == 0
    d_k = H // heads

    if batch_tile is None:
        n_shards = min(B, _tensorcores_per_device())
        batch_tile = _pick_batch_tile(B, S, n_shards=n_shards)
    assert B % batch_tile == 0
    grid = (B // batch_tile,)

    x_spec = pl.BlockSpec((batch_tile, S, H), lambda i: (i, 0, 0))
    out_spec = pl.BlockSpec((batch_tile, S, H), lambda i: (i, 0, 0))
    # TODO(synk): A/B a lane-dense (bt, S*H) output slab (unmasked vst) against
    # the extra in-kernel repack it needs; at S*H=256 the win is marginal.

    self_attn = (query is key) and (key is value)

    if self_attn:
        kernel = functools.partial(_mha_self_kernel, heads=heads, d_k=d_k,
                                   bt=batch_tile, S=S, H=H)
        in_specs = [x_spec,
                    pl.BlockSpec((H, 3 * H), lambda i: (0, 0)),
                    pl.BlockSpec((1, 3 * H), lambda i: (0, 0)),
                    pl.BlockSpec((H, H), lambda i: (0, 0)),
                    pl.BlockSpec((1, H), lambda i: (0, 0))]
        operands = (query, packed["wqkv_cat"], packed["bqkv_cat"],
                    packed["wo"], packed["bo"])
    else:
        kernel = functools.partial(_mha_kernel, heads=heads, d_k=d_k,
                                   bt=batch_tile, S=S, H=H)
        in_specs = [x_spec, x_spec, x_spec,
                    pl.BlockSpec((3, H, H), lambda i: (0, 0, 0)),
                    pl.BlockSpec((4, H), lambda i: (0, 0)),
                    pl.BlockSpec((H, H), lambda i: (0, 0))]
        operands = (query, key, value, packed["wqkv"], packed["b4"], packed["wo"])

    return pl.pallas_call(
        kernel,
        out_shape=jax.ShapeDtypeStruct((B, S, H), query.dtype),
        grid_spec=pltpu.PrefetchScalarGridSpec(
            num_scalar_prefetch=0,
            grid=grid,
            in_specs=in_specs,
            out_specs=out_spec,
        ),
        # Per-step blocks are a few tens of KiB at these sizes on every chip
        # generation; set vmem_limit_bytes here only if batch_tile / max_rows
        # is scaled up for very large B (budget 4 streams x 2 pipeline bufs).
        compiler_params=pltpu.CompilerParams(
            dimension_semantics=("parallel",)),
    )(*operands)


# ---------------------------------------------------------------------------
# Pure-JAX reference + test harness
# ---------------------------------------------------------------------------

def _reference(query, key, value, params, *, heads):
    """Pure-JAX reference mirroring the PyTorch forward (eval mode)."""
    B, S, H = query.shape
    d_k = H // heads

    def lin(x, wt, b):
        return x @ wt + b

    def split_heads(x):
        return x.reshape(B, S, heads, d_k).transpose(0, 2, 1, 3)  # (B, h, S, d_k)

    q = split_heads(lin(query, params["wq_t"], params["bq"]))
    k = split_heads(lin(key, params["wk_t"], params["bk"]))
    v = split_heads(lin(value, params["wv_t"], params["bv"]))

    scores = jnp.einsum("bhqd,bhkd->bhqk", q, k) / math.sqrt(d_k)
    scores = jnp.clip(scores, -30.0, 30.0) + 1e-5
    p = jax.nn.softmax(scores, axis=-1)
    ctx = jnp.einsum("bhqk,bhkd->bhqd", p, v)
    ctx = ctx.transpose(0, 2, 1, 3).reshape(B, S, H)
    out = ctx @ params["wo_t"] + params["bo"]
    return jnp.maximum(out, 0.0)


def _init_params(key, hidden):
    """Deterministic init matching nn.Linear shapes: W (out,in), b (out,).
    Stored pre-transposed as (in, out); biases as (out,)."""
    bound = 1.0 / math.sqrt(hidden)
    ks = jax.random.split(key, 8)

    def u(k, shape):
        return jax.random.uniform(k, shape, jnp.float32, minval=-bound, maxval=bound)

    return {
        "wq_t": u(ks[0], (hidden, hidden)), "bq": u(ks[1], (hidden,)),
        "wk_t": u(ks[2], (hidden, hidden)), "bk": u(ks[3], (hidden,)),
        "wv_t": u(ks[4], (hidden, hidden)), "bv": u(ks[5], (hidden,)),
        "wo_t": u(ks[6], (hidden, hidden)), "bo": u(ks[7], (hidden,)),
    }


if __name__ == "__main__":
    HEADS, H = 4, 32   # opt = {'short_dim': 32, 'attention_heads': 4, 'dropout': 0.0}
    root = jax.random.PRNGKey(0)

    # (2, 8, False): module's nominal small shape (cross-attention path).
    # (8, 8, False): exercises the fused-batch cross-attention path.
    # (8, 8, True) : exercises the self-attention fast path (q is k is v).
    for B, S, self_attn in ((2, 8, False), (8, 8, False), (8, 8, True)):
        k_q, k_k, k_v, k_p, root = jax.random.split(root, 5)
        params = _init_params(k_p, H)
        packed = pack_params(params)          # packed once, outside the call path

        if self_attn:
            x = jax.random.normal(k_q, (B, S, H), jnp.float32)
            query = key_ = value = x
        else:
            query = jax.random.normal(k_q, (B, S, H), jnp.float32)
            key_ = jax.random.normal(k_k, (B, S, H), jnp.float32)
            value = jax.random.normal(k_v, (B, S, H), jnp.float32)

        out = jax.block_until_ready(
            multi_headed_attention(query, key_, value, packed, heads=HEADS))
        ref = _reference(query, key_, value, params, heads=HEADS)

        assert out.shape == (B, S, H)
        err = float(jnp.max(jnp.abs(out - ref)))
        # Tolerance budget dominated by pl.reciprocal(approx=True) in the
        # softmax denominator; everything else is exact f32.
        assert jnp.allclose(out, ref, atol=5e-3, rtol=5e-3), \
            f"mismatch vs reference at B={B} self_attn={self_attn}: max abs err {err}"

    print("KERNEL_OK")
</pallas_src>

<mosaic_0001>
module attributes {stable_mosaic.version = 11 : i64} {
  func.func @_mha_kernel(%arg0: i32, %arg1: memref<2x8x32xf32, #tpu.memory_space<vmem>>, %arg2: memref<2x8x32xf32, #tpu.memory_space<vmem>>, %arg3: memref<2x8x32xf32, #tpu.memory_space<vmem>>, %arg4: memref<3x32x32xf32, #tpu.memory_space<vmem>>, %arg5: memref<4x32xf32, #tpu.memory_space<vmem>>, %arg6: memref<32x32xf32, #tpu.memory_space<vmem>>, %arg7: memref<2x8x32xf32, #tpu.memory_space<vmem>>) attributes {dimension_semantics = [#tpu.dimension_semantics<parallel>], iteration_bounds = array<i64: 1>, scalar_prefetch = 0 : i64, scratch_operands = 0 : i64, tpu.core_type = #tpu.core_type<tc>, window_params = [{transform_indices = @transform_0, window_bounds = array<i64: 2, 8, 32>}, {transform_indices = @transform_1, window_bounds = array<i64: 2, 8, 32>}, {transform_indices = @transform_2, window_bounds = array<i64: 2, 8, 32>}, {pipeline_mode = #tpu.pipeline_mode<synchronous>, transform_indices = @transform_3, window_bounds = array<i64: 3, 32, 32>}, {pipeline_mode = #tpu.pipeline_mode<synchronous>, transform_indices = @transform_4, window_bounds = array<i64: 4, 32>}, {pipeline_mode = #tpu.pipeline_mode<synchronous>, transform_indices = @transform_5, window_bounds = array<i64: 32, 32>}, {transform_indices = @transform_6, window_bounds = array<i64: 2, 8, 32>}]} {
    %c0 = arith.constant 0 : index
    %c0_0 = arith.constant 0 : index
    %c0_1 = arith.constant 0 : index
    %0 = vector.load %arg1[%c0, %c0_0, %c0_1] : memref<2x8x32xf32, #tpu.memory_space<vmem>>, vector<2x8x32xf32>
    %1 = vector.shape_cast %0 : vector<2x8x32xf32> to vector<16x32xf32>
    %c0_2 = arith.constant 0 : index
    %c0_3 = arith.constant 0 : index
    %c0_4 = arith.constant 0 : index
    %2 = vector.load %arg2[%c0_2, %c0_3, %c0_4] : memref<2x8x32xf32, #tpu.memory_space<vmem>>, vector<2x8x32xf32>
    %3 = vector.shape_cast %2 : vector<2x8x32xf32> to vector<16x32xf32>
    %c0_5 = arith.constant 0 : index
    %c0_6 = arith.constant 0 : index
    %c0_7 = arith.constant 0 : index
    %4 = vector.load %arg3[%c0_5, %c0_6, %c0_7] : memref<2x8x32xf32, #tpu.memory_space<vmem>>, vector<2x8x32xf32>
    %5 = vector.shape_cast %4 : vector<2x8x32xf32> to vector<16x32xf32>
    %c0_8 = arith.constant 0 : index
    %c0_9 = arith.constant 0 : index
    %6 = vector.load %arg5[%c0_8, %c0_9] : memref<4x32xf32, #tpu.memory_space<vmem>>, vector<4x32xf32>
    %c0_10 = arith.constant 0 : index
    %c0_11 = arith.constant 0 : index
    %c0_12 = arith.constant 0 : index
    %7 = vector.load %arg4[%c0_10, %c0_11, %c0_12] : memref<3x32x32xf32, #tpu.memory_space<vmem>>, vector<1x32x32xf32>
    %8 = vector.shape_cast %7 : vector<1x32x32xf32> to vector<32x32xf32>
    %cst = arith.constant dense<0.000000e+00> : vector<16x32xf32>
    %9 = tpu.matmul %1, %8, %cst {dimension_numbers = #tpu.dot_dimension_numbers<[1], [0], [0], [1], [0, 0, 1, 1], [], []>} : vector<16x32xf32>, vector<32x32xf32>, vector<16x32xf32> -> vector<16x32xf32>
    %10 = vector.extract_strided_slice %6 {offsets = [0, 0], sizes = [1, 32], strides = [1, 1]} : vector<4x32xf32> to vector<1x32xf32>
    %11 = vector.broadcast %10 : vector<1x32xf32> to vector<16x32xf32>
    %12 = arith.addf %9, %11 : vector<16x32xf32>
    %c1 = arith.constant 1 : index
    %c0_13 = arith.constant 0 : index
    %c0_14 = arith.constant 0 : index
    %13 = vector.load %arg4[%c1, %c0_13, %c0_14] : memref<3x32x32xf32, #tpu.memory_space<vmem>>, vector<1x32x32xf32>
    %14 = vector.shape_cast %13 : vector<1x32x32xf32> to vector<32x32xf32>
    %cst_15 = arith.constant dense<0.000000e+00> : vector<16x32xf32>
    %15 = tpu.matmul %3, %14, %cst_15 {dimension_numbers = #tpu.dot_dimension_numbers<[1], [0], [0], [1], [0, 0, 1, 1], [], []>} : vector<16x32xf32>, vector<32x32xf32>, vector<16x32xf32> -> vector<16x32xf32>
    %16 = vector.extract_strided_slice %6 {offsets = [1, 0], sizes = [1, 32], strides = [1, 1]} : vector<4x32xf32> to vector<1x32xf32>
    %17 = vector.broadcast %16 : vector<1x32xf32> to vector<16x32xf32>
    %18 = arith.addf %15, %17 : vector<16x32xf32>
    %c2 = arith.constant 2 : index
    %c0_16 = arith.constant 0 : index
    %c0_17 = arith.constant 0 : index
    %19 = vector.load %arg4[%c2, %c0_16, %c0_17] : memref<3x32x32xf32, #tpu.memory_space<vmem>>, vector<1x32x32xf32>
    %20 = vector.shape_cast %19 : vector<1x32x32xf32> to vector<32x32xf32>
    %cst_18 = arith.constant dense<0.000000e+00> : vector<16x32xf32>
    %21 = tpu.matmul %5, %20, %cst_18 {dimension_numbers = #tpu.dot_dimension_numbers<[1], [0], [0], [1], [0, 0, 1, 1], [], []>} : vector<16x32xf32>, vector<32x32xf32>, vector<16x32xf32> -> vector<16x32xf32>
    %22 = vector.extract_strided_slice %6 {offsets = [2, 0], sizes = [1, 32], strides = [1, 1]} : vector<4x32xf32> to vector<1x32xf32>
    %23 = vector.broadcast %22 : vector<1x32xf32> to vector<16x32xf32>
    %24 = arith.addf %21, %23 : vector<16x32xf32>
    %25 = vector.shape_cast %12 : vector<16x32xf32> to vector<2x8x4x8xf32>
    %26 = tpu.transpose %25, [0, 2, 1, 3] : vector<2x8x4x8xf32> -> vector<2x4x8x8xf32>
    %27 = vector.shape_cast %26 : vector<2x4x8x8xf32> to vector<8x8x8xf32>
    %28 = vector.shape_cast %18 : vector<16x32xf32> to vector<2x8x4x8xf32>
    %29 = tpu.transpose %28, [0, 2, 1, 3] : vector<2x8x4x8xf32> -> vector<2x4x8x8xf32>
    %30 = vector.shape_cast %29 : vector<2x4x8x8xf32> to vector<8x8x8xf32>
    %31 = vector.shape_cast %24 : vector<16x32xf32> to vector<2x8x4x8xf32>
    %32 = tpu.transpose %31, [0, 2, 1, 3] : vector<2x8x4x8xf32> -> vector<2x4x8x8xf32>
    %33 = vector.shape_cast %32 : vector<2x4x8x8xf32> to vector<8x8x8xf32>
    "tpu.trace_start"() <{level = 10 : i32, message = "bqd,bkd->bqk"}> : () -> ()
    %cst_19 = arith.constant dense<0.000000e+00> : vector<8x8x8xf32>
    %34 = tpu.matmul %27, %30, %cst_19 {dimension_numbers = #tpu.dot_dimension_numbers<[2], [2], [1], [1], [0, 0, 0, 1, 1, 1], [0], [0]>} : vector<8x8x8xf32>, vector<8x8x8xf32>, vector<8x8x8xf32> -> vector<8x8x8xf32>
    "tpu.trace_stop"() : () -> ()
    %cst_20 = arith.constant 0.353553385 : f32
    %35 = vector.broadcast %cst_20 : f32 to vector<8x8x8xf32>
    %36 = arith.mulf %34, %35 : vector<8x8x8xf32>
    %cst_21 = arith.constant -3.000000e+01 : f32
    %cst_22 = arith.constant 3.000000e+01 : f32
    %37 = vector.broadcast %cst_21 : f32 to vector<8x8x8xf32>
    %38 = arith.maximumf %37, %36 : vector<8x8x8xf32>
    %39 = vector.broadcast %cst_22 : f32 to vector<8x8x8xf32>
    %40 = arith.minimumf %39, %38 : vector<8x8x8xf32>
    %cst_23 = arith.constant 9.99999974E-6 : f32
    %41 = vector.broadcast %cst_23 : f32 to vector<8x8x8xf32>
    %42 = arith.addf %40, %41 : vector<8x8x8xf32>
    %43 = math.exp %42 : vector<8x8x8xf32>
    %cst_24 = arith.constant dense<0.000000e+00> : vector<8x8xf32>
    %44 = vector.multi_reduction <add>, %43, %cst_24 [2] : vector<8x8x8xf32> to vector<8x8xf32>
    %45 = vector.shape_cast %44 : vector<8x8xf32> to vector<8x8x1xf32>
    %46 = tpu.reciprocal %45 {approx = true} : vector<8x8x1xf32> -> vector<8x8x1xf32>
    %47 = vector.broadcast %46 : vector<8x8x1xf32> to vector<8x8x8xf32>
    %48 = arith.mulf %43, %47 : vector<8x8x8xf32>
    "tpu.trace_start"() <{level = 10 : i32, message = "bqk,bkd->bqd"}> : () -> ()
    %cst_25 = arith.constant dense<0.000000e+00> : vector<8x8x8xf32>
    %49 = tpu.matmul %48, %33, %cst_25 {dimension_numbers = #tpu.dot_dimension_numbers<[2], [1], [1], [2], [0, 0, 0, 1, 1, 2], [0], [0]>} : vector<8x8x8xf32>, vector<8x8x8xf32>, vector<8x8x8xf32> -> vector<8x8x8xf32>
    "tpu.trace_stop"() : () -> ()
    %50 = vector.shape_cast %49 : vector<8x8x8xf32> to vector<2x4x8x8xf32>
    %51 = tpu.transpose %50, [0, 2, 1, 3] : vector<2x4x8x8xf32> -> vector<2x8x4x8xf32>
    %52 = vector.shape_cast %51 : vector<2x8x4x8xf32> to vector<16x32xf32>
    %c0_26 = arith.constant 0 : index
    %c0_27 = arith.constant 0 : index
    %53 = vector.load %arg6[%c0_26, %c0_27] : memref<32x32xf32, #tpu.memory_space<vmem>>, vector<32x32xf32>
    %cst_28 = arith.constant dense<0.000000e+00> : vector<16x32xf32>
    %54 = tpu.matmul %52, %53, %cst_28 {dimension_numbers = #tpu.dot_dimension_numbers<[1], [0], [0], [1], [0, 0, 1, 1], [], []>} : vector<16x32xf32>, vector<32x32xf32>, vector<16x32xf32> -> vector<16x32xf32>
    %55 = vector.extract_strided_slice %6 {offsets = [3, 0], sizes = [1, 32], strides = [1, 1]} : vector<4x32xf32> to vector<1x32xf32>
    %56 = vector.broadcast %55 : vector<1x32xf32> to vector<16x32xf32>
    %57 = arith.addf %54, %56 : vector<16x32xf32>
    %cst_29 = arith.constant 0.000000e+00 : f32
    %58 = vector.broadcast %cst_29 : f32 to vector<16x32xf32>
    %59 = arith.maximumf %57, %58 : vector<16x32xf32>
    %60 = vector.shape_cast %59 : vector<16x32xf32> to vector<2x8x32xf32>
    %c0_30 = arith.constant 0 : index
    %c0_31 = arith.constant 0 : index
    %c0_32 = arith.constant 0 : index
    %61 = vector.load %arg7[%c0_30, %c0_31, %c0_32] : memref<2x8x32xf32, #tpu.memory_space<vmem>>, vector<2x8x32xf32>
    tpu.vector_store %arg7[%c0_30, %c0_31, %c0_32], %60 {strides = array<i32>} : memref<2x8x32xf32, #tpu.memory_space<vmem>>, vector<2x8x32xf32>,
    return
  }
  func.func @transform_0(%arg0: i32) -> (i32, i32, i32) {
    %c0_i32 = arith.constant 0 : i32
    %c0_i32_0 = arith.constant 0 : i32
    %c0_i32_1 = arith.constant 0 : i32
    return %arg0, %c0_i32, %c0_i32_0 : i32, i32, i32
  }
  func.func @transform_1(%arg0: i32) -> (i32, i32, i32) {
    %c0_i32 = arith.constant 0 : i32
    %c0_i32_0 = arith.constant 0 : i32
    %c0_i32_1 = arith.constant 0 : i32
    return %arg0, %c0_i32, %c0_i32_0 : i32, i32, i32
  }
  func.func @transform_2(%arg0: i32) -> (i32, i32, i32) {
    %c0_i32 = arith.constant 0 : i32
    %c0_i32_0 = arith.constant 0 : i32
    %c0_i32_1 = arith.constant 0 : i32
    return %arg0, %c0_i32, %c0_i32_0 : i32, i32, i32
  }
  func.func @transform_3(%arg0: i32) -> (i32, i32, i32) {
    %c0_i32 = arith.constant 0 : i32
    %c0_i32_0 = arith.constant 0 : i32
    %c0_i32_1 = arith.constant 0 : i32
    %c0_i32_2 = arith.constant 0 : i32
    return %c0_i32, %c0_i32_0, %c0_i32_1 : i32, i32, i32
  }
  func.func @transform_4(%arg0: i32) -> (i32, i32) {
    %c0_i32 = arith.constant 0 : i32
    %c0_i32_0 = arith.constant 0 : i32
    %c0_i32_1 = arith.constant 0 : i32
    return %c0_i32, %c0_i32_0 : i32, i32
  }
  func.func @transform_5(%arg0: i32) -> (i32, i32) {
    %c0_i32 = arith.constant 0 : i32
    %c0_i32_0 = arith.constant 0 : i32
    %c0_i32_1 = arith.constant 0 : i32
    return %c0_i32, %c0_i32_0 : i32, i32
  }
  func.func @transform_6(%arg0: i32) -> (i32, i32, i32) {
    %c0_i32 = arith.constant 0 : i32
    %c0_i32_0 = arith.constant 0 : i32
    %c0_i32_1 = arith.constant 0 : i32
    return %arg0, %c0_i32, %c0_i32_0 : i32, i32, i32
  }
}

</mosaic_0001>

<llo_original>
// kernel: tpu_custom_call.1
$region0: #{tpu_custom_call.1}
  #allocation0 [shape = 'u32[]', space=smem, size = 0x4, offset = 0x4, fixed_abs, tag = 'smem constant byte address 0x4 - core index']
  #allocation1 [shape = 'u32[144,128]{1,0:T(1,128)}', space=vmem, size = 0x12000, scoped, tag = 'internal scratch']
  %s0 = inlined_call_operand.hbm [shape: f32[2,8,32], index: 0, kind: input, shape index: {}]
  %s1 = inlined_call_operand.hbm [shape: f32[2,8,32], index: 1, kind: input, shape index: {}]
  %s2 = inlined_call_operand.hbm [shape: f32[2,8,32], index: 2, kind: input, shape index: {}]
  %s3 = inlined_call_operand.hbm [shape: f32[3,32,32], index: 3, kind: input, shape index: {}]
  %s4 = inlined_call_operand.vmem [shape: f32[4,32], index: 4, kind: input, shape index: {}]
  %s5 = inlined_call_operand.hbm [shape: f32[32,32], index: 5, kind: input, shape index: {}]
  %s6 = inlined_call_operand.hbm [shape: f32[2,8,32], index: 6, kind: output, shape index: {}]
  %s7 = sld [smem:[#allocation0]]
  $region54: #{tpu_custom_call.1} parent=0
    _
  %s9 = ssub.s32 1, %s7
  %s10 = scalar_select 0, %s9, %s7
  $region1: #{tpu_custom_call.1} parent=0
    #allocation2 [shape = 'u8[8192]{0}', space=vmem, size = 0x2000, scoped, tag = 'input window, operand 0, single buffered']
    #allocation3 [shape = 's32[1]{0}', space=sflag, size = 0x4, scoped, tag = 'scoped memory for tpu_custom_call.1']
    #allocation4 [shape = 's32[1]{0}', space=sflag, size = 0x4, scoped, tag = 'scoped memory for tpu_custom_call.1']
    #allocation5 [shape = 'u8[8192]{0}', space=vmem, size = 0x2000, scoped, tag = 'input window, operand 1, single buffered']
    #allocation6 [shape = 's32[1]{0}', space=sflag, size = 0x4, scoped, tag = 'scoped memory for tpu_custom_call.1']
    #allocation7 [shape = 'u8[8192]{0}', space=vmem, size = 0x2000, scoped, tag = 'input window, operand 2, single buffered']
    #allocation8 [shape = 'u8[49152]{0}', space=vmem, size = 0xc000, scoped, tag = 'input window, operand 3, single buffered']
    #allocation9 [shape = 's32[1]{0}', space=sflag, size = 0x4, scoped, tag = 'scoped memory for tpu_custom_call.1']
    #allocation10 [shape = 'u8[16384]{0}', space=vmem, size = 0x4000, scoped, tag = 'input window, operand 5, single buffered']
    #allocation11 [shape = 'u8[8192]{0}', space=vmem, size = 0x2000, scoped, tag = 'output window, operand 0, single buffered']
    %11 = vsyncpa [#allocation3], 0
    %12 = vsyncpa [#allocation6], 0
    %13 = vsyncpa [#allocation9], 0
    %14 = vsyncpa [#allocation4], 0
    // Predicated region
    $region2: #{tpu_custom_call.1} parent=1 // pred_check
      _
    $region3: #{tpu_custom_call.1} parent=1 // pred_check_branch
      %16 = sbr.rel (0) target = $region5
    $region4: #{tpu_custom_call.1} parent=1 // pred_region
      %s18 = ssub.s32 256, 256
      %19 = vsyncadd [#allocation3], %s18
      %s20 = sshll.u32 [#allocation2], 4
      %s21 = int_to_ptr.vmem [resolvable:$true] %s20
      %26 = dma.hbm_to_vmem [thread:$0]  %s0, 256, %s21, [#allocation3], 128, 128, 8
    $region5: #{tpu_custom_call.1} parent=1 // pred_fallthru
      _
    // Predicated region
    $region6: #{tpu_custom_call.1} parent=1 // pred_check
      _
    $region7: #{tpu_custom_call.1} parent=1 // pred_check_branch
      %28 = sbr.rel (0) target = $region9
    $region8: #{tpu_custom_call.1} parent=1 // pred_region
      %s30 = ssub.s32 256, 256
      %31 = vsyncadd [#allocation6], %s30
      %s32 = sshll.u32 [#allocation5], 4
      %s33 = int_to_ptr.vmem [resolvable:$true] %s32
      %38 = dma.hbm_to_vmem [thread:$0]  %s1, 256, %s33, [#allocation6], 128, 128, 8
    $region9: #{tpu_custom_call.1} parent=1 // pred_fallthru
      _
    // Predicated region
    $region10: #{tpu_custom_call.1} parent=1 // pred_check
      _
    $region11: #{tpu_custom_call.1} parent=1 // pred_check_branch
      %40 = sbr.rel (0) target = $region13
    $region12: #{tpu_custom_call.1} parent=1 // pred_region
      %s42 = ssub.s32 256, 256
      %43 = vsyncadd [#allocation6], %s42
      %s44 = sshll.u32 [#allocation7], 4
      %s45 = int_to_ptr.vmem [resolvable:$true] %s44
      %50 = dma.hbm_to_vmem [thread:$0]  %s2, 256, %s45, [#allocation6], 128, 128, 8
    $region13: #{tpu_custom_call.1} parent=1 // pred_fallthru
      _
    // Predicated region
    $region14: #{tpu_custom_call.1} parent=1 // pred_check
      _
    $region15: #{tpu_custom_call.1} parent=1 // pred_check_branch
      %52 = sbr.rel (0) target = $region17
    $region16: #{tpu_custom_call.1} parent=1 // pred_region
      %s54 = ssub.s32 1536, 1536
      %55 = vsyncadd [#allocation9], %s54
      %s56 = sshll.u32 [#allocation8], 4
      %s57 = int_to_ptr.vmem [resolvable:$true] %s56
      %62 = dma.hbm_to_vmem [thread:$0]  %s3, 1536, %s57, [#allocation9], 128, 128, 8
    $region17: #{tpu_custom_call.1} parent=1 // pred_fallthru
      _
    // Predicated region
    $region18: #{tpu_custom_call.1} parent=1 // pred_check
      _
    $region19: #{tpu_custom_call.1} parent=1 // pred_check_branch
      %64 = sbr.rel (0) target = $region21
    $region20: #{tpu_custom_call.1} parent=1 // pred_region
      _
    $region21: #{tpu_custom_call.1} parent=1 // pred_fallthru
      _
    // Predicated region
    $region22: #{tpu_custom_call.1} parent=1 // pred_check
      _
    $region23: #{tpu_custom_call.1} parent=1 // pred_check_branch
      %66 = sbr.rel (0) target = $region25
    $region24: #{tpu_custom_call.1} parent=1 // pred_region
      %s68 = ssub.s32 512, 512
      %69 = vsyncadd [#allocation9], %s68
      %s70 = sshll.u32 [#allocation10], 4
      %s71 = int_to_ptr.vmem [resolvable:$true] %s70
      %76 = dma.hbm_to_vmem [thread:$0]  %s5, 512, %s71, [#allocation9], 128, 128, 8
    $region25: #{tpu_custom_call.1} parent=1 // pred_fallthru
      _
    // Predicated region
    $region26: #{tpu_custom_call.1} parent=1 // pred_check
      _
    $region27: #{tpu_custom_call.1} parent=1 // pred_check_branch
      %78 = sbr.rel (0) target = $region29
    $region28: #{tpu_custom_call.1} parent=1 // pred_region
      %79 = dma.done [#allocation3], 256
    $region29: #{tpu_custom_call.1} parent=1 // pred_fallthru
      _
    // Predicated region
    $region30: #{tpu_custom_call.1} parent=1 // pred_check
      _
    $region31: #{tpu_custom_call.1} parent=1 // pred_check_branch
      %81 = sbr.rel (0) target = $region33
    $region32: #{tpu_custom_call.1} parent=1 // pred_region
      %82 = dma.done [#allocation6], 256
    $region33: #{tpu_custom_call.1} parent=1 // pred_fallthru
      _
    // Predicated region
    $region34: #{tpu_custom_call.1} parent=1 // pred_check
      _
    $region35: #{tpu_custom_call.1} parent=1 // pred_check_branch
      %84 = sbr.rel (0) target = $region37
    $region36: #{tpu_custom_call.1} parent=1 // pred_region
      %85 = dma.done [#allocation6], 256
    $region37: #{tpu_custom_call.1} parent=1 // pred_fallthru
      _
    // Predicated region
    $region38: #{tpu_custom_call.1} parent=1 // pred_check
      _
    $region39: #{tpu_custom_call.1} parent=1 // pred_check_branch
      %87 = sbr.rel (0) target = $region41
    $region40: #{tpu_custom_call.1} parent=1 // pred_region
      %88 = dma.done [#allocation9], 1536
    $region41: #{tpu_custom_call.1} parent=1 // pred_fallthru
      _
    // Predicated region
    $region42: #{tpu_custom_call.1} parent=1 // pred_check
      _
    $region43: #{tpu_custom_call.1} parent=1 // pred_check_branch
      %90 = sbr.rel (0) target = $region45
    $region44: #{tpu_custom_call.1} parent=1 // pred_region
      %91 = dma.done [#allocation9], 512
    $region45: #{tpu_custom_call.1} parent=1 // pred_fallthru
      _
    %v92 = vld [vmem:[#allocation2] sm:$0xff]
    %v93 = vld [vmem:[#allocation2 + $0x8] sm:$0xff]
    %v94 = vld [vmem:[#allocation5] sm:$0xff]
    %v95 = vld [vmem:[#allocation5 + $0x8] sm:$0xff]
    %v96 = vld [vmem:[#allocation7] sm:$0xff]
    %v97 = vld [vmem:[#allocation7 + $0x8] sm:$0xff]
    %v98 = vld [vmem:[%s4] sm:$0xf]
    %v99 = vld [vmem:[#allocation8] sm:$0xff]
    %v100 = vld [vmem:[#allocation8 + $0x8] sm:$0xff]
    %v101 = vld [vmem:[#allocation8 + $0x10] sm:$0xff]
    %v102 = vld [vmem:[#allocation8 + $0x18] sm:$0xff]
    %v103 = vlaneseq
    %v104 = vshrl.u32 %v103, 7
    %v105 = vsub.s32 0, %v104
    %v106 = vrot.slane %v98, %v105
    %vm107 = vcmask 261120
    %v109 = vsel %vm107, %v92, 0
    %v112 = vsel %vm107, %v93, 0
    %114 = vmatprep.subr.mxu0 0.0
    %115 = vmatpush1.msra.mxu0 %v99
    %116 = vmatprep.subr.mxu0 0.0
    %117 = vmatpush1.msra.mxu0 %v100
    %118 = vmatprep.subr.mxu0 0.0
    %119 = vmatpush1.msra.mxu0 %v101
    %120 = vmatprep.subr.mxu0 0.0
    %121 = vmatpush1.msra.mxu0 %v102
    %122 = vmatprep.subr.mxu0 0.0
    %123 = vmatpush1.msra.mxu0 0.0
    %124 = vmatprep.subr.mxu0 0.0
    %125 = vmatpush1.msra.mxu0 0.0
    %126 = vmatprep.subr.mxu0 0.0
    %127 = vmatpush1.msra.mxu0 0.0
    %128 = vmatprep.subr.mxu0 0.0
    %129 = vmatpush1.msra.mxu0 0.0
    %130 = vmatprep.subr.mxu0 0.0
    %131 = vmatpush1.msra.mxu0 0.0
    %132 = vmatprep.subr.mxu0 0.0
    %133 = vmatpush1.msra.mxu0 0.0
    %134 = vmatprep.subr.mxu0 0.0
    %135 = vmatpush1.msra.mxu0 0.0
    %136 = vmatprep.subr.mxu0 0.0
    %137 = vmatpush1.msra.mxu0 0.0
    %138 = vmatprep.subr.mxu0 0.0
    %139 = vmatpush1.msra.mxu0 0.0
    %140 = vmatprep.subr.mxu0 0.0
    %141 = vmatpush1.msra.mxu0 0.0
    %142 = vmatprep.subr.mxu0 0.0
    %143 = vmatpush1.msra.mxu0 0.0
    %144 = vmatprep.subr.mxu0 0.0
    %145 = vmatpush1.msra.mxu0 0.0
    %146 = vmatprep.subr.mxu0 0.0
    %147 = vmatpush1.msra.mxu0 0.0
    %148 = vmatprep.subr.mxu0 0.0
    %149 = vmatpush1.msra.mxu0 0.0
    %150 = vmatprep.subr.mxu0 0.0
    %151 = vmatpush1.msra.mxu0 0.0
    %152 = vmatprep.subr.mxu0 0.0
    %153 = vmatpush1.msra.mxu0 0.0
    %154 = vmatprep.subr.mxu0 0.0
    %155 = vmatpush1.msra.mxu0 0.0
    %156 = vmatprep.subr.mxu0 0.0
    %157 = vmatpush1.msra.mxu0 0.0
    %158 = vmatprep.subr.mxu0 0.0
    %159 = vmatpush1.msra.mxu0 0.0
    %160 = vmatprep.subr.mxu0 0.0
    %161 = vmatpush1.msra.mxu0 0.0
    %162 = vmatprep.subr.mxu0 0.0
    %163 = vmatpush1.msra.mxu0 0.0
    %164 = vmatprep.subr.mxu0 0.0
    %165 = vmatpush1.msra.mxu0 0.0
    %166 = vmatprep.subr.mxu0 0.0
    %167 = vmatpush1.msra.mxu0 0.0
    %168 = vmatprep.subr.mxu0 0.0
    %169 = vmatpush1.msra.mxu0 0.0
    %170 = vmatprep.subr.mxu0 0.0
    %171 = vmatpush1.msra.mxu0 0.0
    %172 = vmatprep.subr.mxu0 0.0
    %173 = vmatpush1.msra.mxu0 0.0
    %174 = vmatprep.subr.mxu0 0.0
    %175 = vmatpush1.msra.mxu0 0.0
    %176 = vmatprep.subr.mxu0 0.0
    %177 = vmatpush1.msra.mxu0 0.0
    %178 = vmatprep.mubr.f32.mxu0 0.0
    %179 = vmatmul.mubr.f32.gmra.mrb[0].mxu0 %v109
    %v180 = vpop.f32.mrb[0].mxu0
    %v181 = vadd.f32 %v106, %v180
    %v182 = vpop.f32.mrb[0].mxu0
    %183 = vmatprep.mubr.f32.mxu0 0.0
    %184 = vmatmul.mubr.f32.gmra.mrb[0].mxu0 %v112
    %v185 = vpop.f32.mrb[0].mxu0
    %v186 = vadd.f32 %v106, %v185
    %v187 = vpop.f32.mrb[0].mxu0
    %188 = vdwg.mxu0
    %s189 = scalar_lea.vmem [#allocation8], 32
    %v190 = vld [vmem:[%s189] sm:$0xff]
    %v191 = vld [vmem:[%s189 + $0x8] sm:$0xff]
    %v192 = vld [vmem:[%s189 + $0x10] sm:$0xff]
    %v193 = vld [vmem:[%s189 + $0x18] sm:$0xff]
    %v194 = vlaneseq
    %v195 = vshrl.u32 %v194, 7
    %v196 = vsub.s32 1, %v195
    %v197 = vrot.slane %v98, %v196
    %v199 = vsel %vm107, %v94, 0
    %v202 = vsel %vm107, %v95, 0
    %204 = vmatprep.subr.mxu0 0.0
    %205 = vmatpush1.msra.mxu0 %v190
    %206 = vmatprep.subr.mxu0 0.0
    %207 = vmatpush1.msra.mxu0 %v191
    %208 = vmatprep.subr.mxu0 0.0
    %209 = vmatpush1.msra.mxu0 %v192
    %210 = vmatprep.subr.mxu0 0.0
    %211 = vmatpush1.msra.mxu0 %v193
    %212 = vmatprep.subr.mxu0 0.0
    %213 = vmatpush1.msra.mxu0 0.0
    %214 = vmatprep.subr.mxu0 0.0
    %215 = vmatpush1.msra.mxu0 0.0
    %216 = vmatprep.subr.mxu0 0.0
    %217 = vmatpush1.msra.mxu0 0.0
    %218 = vmatprep.subr.mxu0 0.0
    %219 = vmatpush1.msra.mxu0 0.0
    %220 = vmatprep.subr.mxu0 0.0
    %221 = vmatpush1.msra.mxu0 0.0
    %222 = vmatprep.subr.mxu0 0.0
    %223 = vmatpush1.msra.mxu0 0.0
    %224 = vmatprep.subr.mxu0 0.0
    %225 = vmatpush1.msra.mxu0 0.0
    %226 = vmatprep.subr.mxu0 0.0
    %227 = vmatpush1.msra.mxu0 0.0
    %228 = vmatprep.subr.mxu0 0.0
    %229 = vmatpush1.msra.mxu0 0.0
    %230 = vmatprep.subr.mxu0 0.0
    %231 = vmatpush1.msra.mxu0 0.0
    %232 = vmatprep.subr.mxu0 0.0
    %233 = vmatpush1.msra.mxu0 0.0
    %234 = vmatprep.subr.mxu0 0.0
    %235 = vmatpush1.msra.mxu0 0.0
    %236 = vmatprep.subr.mxu0 0.0
    %237 = vmatpush1.msra.mxu0 0.0
    %238 = vmatprep.subr.mxu0 0.0
    %239 = vmatpush1.msra.mxu0 0.0
    %240 = vmatprep.subr.mxu0 0.0
    %241 = vmatpush1.msra.mxu0 0.0
    %242 = vmatprep.subr.mxu0 0.0
    %243 = vmatpush1.msra.mxu0 0.0
    %244 = vmatprep.subr.mxu0 0.0
    %245 = vmatpush1.msra.mxu0 0.0
    %246 = vmatprep.subr.mxu0 0.0
    %247 = vmatpush1.msra.mxu0 0.0
    %248 = vmatprep.subr.mxu0 0.0
    %249 = vmatpush1.msra.mxu0 0.0
    %250 = vmatprep.subr.mxu0 0.0
    %251 = vmatpush1.msra.mxu0 0.0
    %252 = vmatprep.subr.mxu0 0.0
    %253 = vmatpush1.msra.mxu0 0.0
    %254 = vmatprep.subr.mxu0 0.0
    %255 = vmatpush1.msra.mxu0 0.0
    %256 = vmatprep.subr.mxu0 0.0
    %257 = vmatpush1.msra.mxu0 0.0
    %258 = vmatprep.subr.mxu0 0.0
    %259 = vmatpush1.msra.mxu0 0.0
    %260 = vmatprep.subr.mxu0 0.0
    %261 = vmatpush1.msra.mxu0 0.0
    %262 = vmatprep.subr.mxu0 0.0
    %263 = vmatpush1.msra.mxu0 0.0
    %264 = vmatprep.subr.mxu0 0.0
    %265 = vmatpush1.msra.mxu0 0.0
    %266 = vmatprep.subr.mxu0 0.0
    %267 = vmatpush1.msra.mxu0 0.0
    %268 = vmatprep.mubr.f32.mxu0 0.0
    %269 = vmatmul.mubr.f32.gmra.mrb[0].mxu0 %v199
    %v270 = vpop.f32.mrb[0].mxu0
    %v271 = vadd.f32 %v197, %v270
    %v272 = vpop.f32.mrb[0].mxu0
    %273 = vmatprep.mubr.f32.mxu0 0.0
    %274 = vmatmul.mubr.f32.gmra.mrb[0].mxu0 %v202
    %v275 = vpop.f32.mrb[0].mxu0
    %v276 = vadd.f32 %v197, %v275
    %v277 = vpop.f32.mrb[0].mxu0
    %278 = vdwg.mxu0
    %s279 = scalar_lea.vmem [#allocation8], 64
    %v280 = vld [vmem:[%s279] sm:$0xff]
    %v281 = vld [vmem:[%s279 + $0x8] sm:$0xff]
    %v282 = vld [vmem:[%s279 + $0x10] sm:$0xff]
    %v283 = vld [vmem:[%s279 + $0x18] sm:$0xff]
    %v284 = vlaneseq
    %v285 = vshrl.u32 %v284, 7
    %v286 = vsub.s32 2, %v285
    %v287 = vrot.slane %v98, %v286
    %v289 = vsel %vm107, %v96, 0
    %v292 = vsel %vm107, %v97, 0
    %294 = vmatprep.subr.mxu0 0.0
    %295 = vmatpush1.msra.mxu0 %v280
    %296 = vmatprep.subr.mxu0 0.0
    %297 = vmatpush1.msra.mxu0 %v281
    %298 = vmatprep.subr.mxu0 0.0
    %299 = vmatpush1.msra.mxu0 %v282
    %300 = vmatprep.subr.mxu0 0.0
    %301 = vmatpush1.msra.mxu0 %v283
    %302 = vmatprep.subr.mxu0 0.0
    %303 = vmatpush1.msra.mxu0 0.0
    %304 = vmatprep.subr.mxu0 0.0
    %305 = vmatpush1.msra.mxu0 0.0
    %306 = vmatprep.subr.mxu0 0.0
    %307 = vmatpush1.msra.mxu0 0.0
    %308 = vmatprep.subr.mxu0 0.0
    %309 = vmatpush1.msra.mxu0 0.0
    %310 = vmatprep.subr.mxu0 0.0
    %311 = vmatpush1.msra.mxu0 0.0
    %312 = vmatprep.subr.mxu0 0.0
    %313 = vmatpush1.msra.mxu0 0.0
    %314 = vmatprep.subr.mxu0 0.0
    %315 = vmatpush1.msra.mxu0 0.0
    %316 = vmatprep.subr.mxu0 0.0
    %317 = vmatpush1.msra.mxu0 0.0
    %318 = vmatprep.subr.mxu0 0.0
    %319 = vmatpush1.msra.mxu0 0.0
    %320 = vmatprep.subr.mxu0 0.0
    %321 = vmatpush1.msra.mxu0 0.0
    %322 = vmatprep.subr.mxu0 0.0
    %323 = vmatpush1.msra.mxu0 0.0
    %324 = vmatprep.subr.mxu0 0.0
    %325 = vmatpush1.msra.mxu0 0.0
    %326 = vmatprep.subr.mxu0 0.0
    %327 = vmatpush1.msra.mxu0 0.0
    %328 = vmatprep.subr.mxu0 0.0
    %329 = vmatpush1.msra.mxu0 0.0
    %330 = vmatprep.subr.mxu0 0.0
    %331 = vmatpush1.msra.mxu0 0.0
    %332 = vmatprep.subr.mxu0 0.0
    %333 = vmatpush1.msra.mxu0 0.0
    %334 = vmatprep.subr.mxu0 0.0
    %335 = vmatpush1.msra.mxu0 0.0
    %336 = vmatprep.subr.mxu0 0.0
    %337 = vmatpush1.msra.mxu0 0.0
    %338 = vmatprep.subr.mxu0 0.0
    %339 = vmatpush1.msra.mxu0 0.0
    %340 = vmatprep.subr.mxu0 0.0
    %341 = vmatpush1.msra.mxu0 0.0
    %342 = vmatprep.subr.mxu0 0.0
    %343 = vmatpush1.msra.mxu0 0.0
    %344 = vmatprep.subr.mxu0 0.0
    %345 = vmatpush1.msra.mxu0 0.0
    %346 = vmatprep.subr.mxu0 0.0
    %347 = vmatpush1.msra.mxu0 0.0
    %348 = vmatprep.subr.mxu0 0.0
    %349 = vmatpush1.msra.mxu0 0.0
    %350 = vmatprep.subr.mxu0 0.0
    %351 = vmatpush1.msra.mxu0 0.0
    %352 = vmatprep.subr.mxu0 0.0
    %353 = vmatpush1.msra.mxu0 0.0
    %354 = vmatprep.subr.mxu0 0.0
    %355 = vmatpush1.msra.mxu0 0.0
    %356 = vmatprep.subr.mxu0 0.0
    %357 = vmatpush1.msra.mxu0 0.0
    %358 = vmatprep.mubr.f32.mxu0 0.0
    %359 = vmatmul.mubr.f32.gmra.mrb[0].mxu0 %v289
    %v360 = vpop.f32.mrb[0].mxu0
    %v361 = vadd.f32 %v287, %v360
    %v362 = vpop.f32.mrb[0].mxu0
    %363 = vmatprep.mubr.f32.mxu0 0.0
    %364 = vmatmul.mubr.f32.gmra.mrb[0].mxu0 %v292
    %v365 = vpop.f32.mrb[0].mxu0
    %v366 = vadd.f32 %v287, %v365
    %v367 = vpop.f32.mrb[0].mxu0
    %368 = vdwg.mxu0
    %371 = vrot.lane.b32.xlu0 %v181, 120
    %v372 = vpop.permute.xlu0 %371
    %373 = vrot.lane.b32.xlu0 %v186, 120
    %v374 = vpop.permute.xlu0 %373
    %377 = vrot.lane.b32.xlu0 %v181, 112
    %v378 = vpop.permute.xlu0 %377
    %379 = vrot.lane.b32.xlu0 %v186, 112
    %v380 = vpop.permute.xlu0 %379
    %383 = vrot.lane.b32.xlu0 %v181, 104
    %v384 = vpop.permute.xlu0 %383
    %385 = vrot.lane.b32.xlu0 %v186, 104
    %v386 = vpop.permute.xlu0 %385
    %v389 = vcombine.low %v181, %v378
    %v390 = vcombine.high %v181, %v378
    %v392 = vunpack.c.l.s4 1983009808
    %v393 = vunpack.c.0.s8 %v392
    %v394 = vlaneseq
    %v395 = vshrl.u32 %v394, 7
    %v396 = vsub.s32 %v393, %v395
    %v397 = vrot.slane %v389, %v396
    %v399 = vunpack.c.l.s4 1983009808
    %v400 = vunpack.c.0.s8 %v399
    %v401 = vlaneseq
    %v402 = vshrl.u32 %v401, 7
    %v403 = vsub.s32 %v400, %v402
    %v404 = vrot.slane %v390, %v403
    %v405 = vcombine.low %v372, %v384
    %v406 = vcombine.high %v372, %v384
    %v408 = vunpack.c.l.s4 1983009808
    %v409 = vunpack.c.0.s8 %v408
    %v410 = vlaneseq
    %v411 = vshrl.u32 %v410, 7
    %v412 = vsub.s32 %v409, %v411
    %v413 = vrot.slane %v405, %v412
    %v415 = vunpack.c.l.s4 1983009808
    %v416 = vunpack.c.0.s8 %v415
    %v417 = vlaneseq
    %v418 = vshrl.u32 %v417, 7
    %v419 = vsub.s32 %v416, %v418
    %v420 = vrot.slane %v406, %v419
    %v421 = vcombine.low %v397, %v413
    %v422 = vcombine.high %v397, %v413
    %v424 = vunpack.c.l.s4 1934713408
    %v425 = vunpack.c.0.s8 %v424
    %v426 = vlaneseq
    %v427 = vshrl.u32 %v426, 7
    %v428 = vsub.s32 %v425, %v427
    %v429 = vrot.slane %v421, %v428
    %v431 = vunpack.c.l.s4 1934713408
    %v432 = vunpack.c.0.s8 %v431
    %v433 = vlaneseq
    %v434 = vshrl.u32 %v433, 7
    %v435 = vsub.s32 %v432, %v434
    %v436 = vrot.slane %v422, %v435
    %v437 = vcombine.low %v404, %v420
    %v438 = vcombine.high %v404, %v420
    %v440 = vunpack.c.l.s4 1934713408
    %v441 = vunpack.c.0.s8 %v440
    %v442 = vlaneseq
    %v443 = vshrl.u32 %v442, 7
    %v444 = vsub.s32 %v441, %v443
    %v445 = vrot.slane %v437, %v444
    %v447 = vunpack.c.l.s4 1934713408
    %v448 = vunpack.c.0.s8 %v447
    %v449 = vlaneseq
    %v450 = vshrl.u32 %v449, 7
    %v451 = vsub.s32 %v448, %v450
    %v452 = vrot.slane %v438, %v451
    %v453 = vcombine.high %v429, 0.0
    %v454 = vcombine.high %v436, 0.0
    %v455 = vcombine.high %v445, 0.0
    %v456 = vcombine.high %v452, 0.0
    %v457 = vcombine.low %v186, %v380
    %v458 = vcombine.high %v186, %v380
    %v460 = vunpack.c.l.s4 1983009808
    %v461 = vunpack.c.0.s8 %v460
    %v462 = vlaneseq
    %v463 = vshrl.u32 %v462, 7
    %v464 = vsub.s32 %v461, %v463
    %v465 = vrot.slane %v457, %v464
    %v467 = vunpack.c.l.s4 1983009808
    %v468 = vunpack.c.0.s8 %v467
    %v469 = vlaneseq
    %v470 = vshrl.u32 %v469, 7
    %v471 = vsub.s32 %v468, %v470
    %v472 = vrot.slane %v458, %v471
    %v473 = vcombine.low %v374, %v386
    %v474 = vcombine.high %v374, %v386
    %v476 = vunpack.c.l.s4 1983009808
    %v477 = vunpack.c.0.s8 %v476
    %v478 = vlaneseq
    %v479 = vshrl.u32 %v478, 7
    %v480 = vsub.s32 %v477, %v479
    %v481 = vrot.slane %v473, %v480
    %v483 = vunpack.c.l.s4 1983009808
    %v484 = vunpack.c.0.s8 %v483
    %v485 = vlaneseq
    %v486 = vshrl.u32 %v485, 7
    %v487 = vsub.s32 %v484, %v486
    %v488 = vrot.slane %v474, %v487
    %v489 = vcombine.low %v465, %v481
    %v490 = vcombine.high %v465, %v481
    %v492 = vunpack.c.l.s4 1934713408
    %v493 = vunpack.c.0.s8 %v492
    %v494 = vlaneseq
    %v495 = vshrl.u32 %v494, 7
    %v496 = vsub.s32 %v493, %v495
    %v497 = vrot.slane %v489, %v496
    %v499 = vunpack.c.l.s4 1934713408
    %v500 = vunpack.c.0.s8 %v499
    %v501 = vlaneseq
    %v502 = vshrl.u32 %v501, 7
    %v503 = vsub.s32 %v500, %v502
    %v504 = vrot.slane %v490, %v503
    %v505 = vcombine.low %v472, %v488
    %v506 = vcombine.high %v472, %v488
    %v508 = vunpack.c.l.s4 1934713408
    %v509 = vunpack.c.0.s8 %v508
    %v510 = vlaneseq
    %v511 = vshrl.u32 %v510, 7
    %v512 = vsub.s32 %v509, %v511
    %v513 = vrot.slane %v505, %v512
    %v515 = vunpack.c.l.s4 1934713408
    %v516 = vunpack.c.0.s8 %v515
    %v517 = vlaneseq
    %v518 = vshrl.u32 %v517, 7
    %v519 = vsub.s32 %v516, %v518
    %v520 = vrot.slane %v506, %v519
    %v521 = vcombine.high %v497, 0.0
    %v522 = vcombine.high %v504, 0.0
    %v523 = vcombine.high %v513, 0.0
    %v524 = vcombine.high %v520, 0.0
    %v525 = vcombine.low %v429, %v436
    %v527 = vunpack.c.l.s4 1983009808
    %v528 = vunpack.c.0.s8 %v527
    %v529 = vlaneseq
    %v530 = vshrl.u32 %v529, 7
    %v531 = vsub.s32 %v528, %v530
    %v532 = vrot.slane %v525, %v531
    %v533 = vcombine.low %v453, %v454
    %v535 = vunpack.c.l.s4 1983009808
    %v536 = vunpack.c.0.s8 %v535
    %v537 = vlaneseq
    %v538 = vshrl.u32 %v537, 7
    %v539 = vsub.s32 %v536, %v538
    %v540 = vrot.slane %v533, %v539
    %v541 = vcombine.low %v445, %v452
    %v543 = vunpack.c.l.s4 1983009808
    %v544 = vunpack.c.0.s8 %v543
    %v545 = vlaneseq
    %v546 = vshrl.u32 %v545, 7
    %v547 = vsub.s32 %v544, %v546
    %v548 = vrot.slane %v541, %v547
    %v549 = vcombine.low %v455, %v456
    %v551 = vunpack.c.l.s4 1983009808
    %v552 = vunpack.c.0.s8 %v551
    %v553 = vlaneseq
    %v554 = vshrl.u32 %v553, 7
    %v555 = vsub.s32 %v552, %v554
    %v556 = vrot.slane %v549, %v555
    %v557 = vcombine.low %v532, %v540
    %v558 = vcombine.high %v532, %v540
    %v560 = vunpack.c.l.s4 1934713408
    %v561 = vunpack.c.0.s8 %v560
    %v562 = vlaneseq
    %v563 = vshrl.u32 %v562, 7
    %v564 = vsub.s32 %v561, %v563
    %v565 = vrot.slane %v557, %v564
    %v567 = vunpack.c.l.s4 1934713408
    %v568 = vunpack.c.0.s8 %v567
    %v569 = vlaneseq
    %v570 = vshrl.u32 %v569, 7
    %v571 = vsub.s32 %v568, %v570
    %v572 = vrot.slane %v558, %v571
    %v573 = vcombine.low %v548, %v556
    %v574 = vcombine.high %v548, %v556
    %v576 = vunpack.c.l.s4 1934713408
    %v577 = vunpack.c.0.s8 %v576
    %v578 = vlaneseq
    %v579 = vshrl.u32 %v578, 7
    %v580 = vsub.s32 %v577, %v579
    %v581 = vrot.slane %v573, %v580
    %v583 = vunpack.c.l.s4 1934713408
    %v584 = vunpack.c.0.s8 %v583
    %v585 = vlaneseq
    %v586 = vshrl.u32 %v585, 7
    %v587 = vsub.s32 %v584, %v586
    %v588 = vrot.slane %v574, %v587
    %v589 = vcombine.low %v565, %v581
    %v590 = vcombine.high %v565, %v581
    %v591 = vcombine.low %v572, %v588
    %v592 = vcombine.high %v572, %v588
    %v593 = vcombine.low %v497, %v504
    %v595 = vunpack.c.l.s4 1983009808
    %v596 = vunpack.c.0.s8 %v595
    %v597 = vlaneseq
    %v598 = vshrl.u32 %v597, 7
    %v599 = vsub.s32 %v596, %v598
    %v600 = vrot.slane %v593, %v599
    %v601 = vcombine.low %v521, %v522
    %v603 = vunpack.c.l.s4 1983009808
    %v604 = vunpack.c.0.s8 %v603
    %v605 = vlaneseq
    %v606 = vshrl.u32 %v605, 7
    %v607 = vsub.s32 %v604, %v606
    %v608 = vrot.slane %v601, %v607
    %v609 = vcombine.low %v513, %v520
    %v611 = vunpack.c.l.s4 1983009808
    %v612 = vunpack.c.0.s8 %v611
    %v613 = vlaneseq
    %v614 = vshrl.u32 %v613, 7
    %v615 = vsub.s32 %v612, %v614
    %v616 = vrot.slane %v609, %v615
    %v617 = vcombine.low %v523, %v524
    %v619 = vunpack.c.l.s4 1983009808
    %v620 = vunpack.c.0.s8 %v619
    %v621 = vlaneseq
    %v622 = vshrl.u32 %v621, 7
    %v623 = vsub.s32 %v620, %v622
    %v624 = vrot.slane %v617, %v623
    %v625 = vcombine.low %v600, %v608
    %v626 = vcombine.high %v600, %v608
    %v628 = vunpack.c.l.s4 1934713408
    %v629 = vunpack.c.0.s8 %v628
    %v630 = vlaneseq
    %v631 = vshrl.u32 %v630, 7
    %v632 = vsub.s32 %v629, %v631
    %v633 = vrot.slane %v625, %v632
    %v635 = vunpack.c.l.s4 1934713408
    %v636 = vunpack.c.0.s8 %v635
    %v637 = vlaneseq
    %v638 = vshrl.u32 %v637, 7
    %v639 = vsub.s32 %v636, %v638
    %v640 = vrot.slane %v626, %v639
    %v641 = vcombine.low %v616, %v624
    %v642 = vcombine.high %v616, %v624
    %v644 = vunpack.c.l.s4 1934713408
    %v645 = vunpack.c.0.s8 %v644
    %v646 = vlaneseq
    %v647 = vshrl.u32 %v646, 7
    %v648 = vsub.s32 %v645, %v647
    %v649 = vrot.slane %v641, %v648
    %v651 = vunpack.c.l.s4 1934713408
    %v652 = vunpack.c.0.s8 %v651
    %v653 = vlaneseq
    %v654 = vshrl.u32 %v653, 7
    %v655 = vsub.s32 %v652, %v654
    %v656 = vrot.slane %v642, %v655
    %v657 = vcombine.low %v633, %v649
    %v658 = vcombine.high %v633, %v649
    %v659 = vcombine.low %v640, %v656
    %v660 = vcombine.high %v640, %v656
    %663 = vrot.lane.b32.xlu0 %v271, 120
    %v664 = vpop.permute.xlu0 %663
    %665 = vrot.lane.b32.xlu0 %v276, 120
    %v666 = vpop.permute.xlu0 %665
    %669 = vrot.lane.b32.xlu0 %v271, 112
    %v670 = vpop.permute.xlu0 %669
    %671 = vrot.lane.b32.xlu0 %v276, 112
    %v672 = vpop.permute.xlu0 %671
    %675 = vrot.lane.b32.xlu0 %v271, 104
    %v676 = vpop.permute.xlu0 %675
    %677 = vrot.lane.b32.xlu0 %v276, 104
    %v678 = vpop.permute.xlu0 %677
    %v681 = vcombine.low %v271, %v670
    %v682 = vcombine.high %v271, %v670
    %v684 = vunpack.c.l.s4 1983009808
    %v685 = vunpack.c.0.s8 %v684
    %v686 = vlaneseq
    %v687 = vshrl.u32 %v686, 7
    %v688 = vsub.s32 %v685, %v687
    %v689 = vrot.slane %v681, %v688
    %v691 = vunpack.c.l.s4 1983009808
    %v692 = vunpack.c.0.s8 %v691
    %v693 = vlaneseq
    %v694 = vshrl.u32 %v693, 7
    %v695 = vsub.s32 %v692, %v694
    %v696 = vrot.slane %v682, %v695
    %v697 = vcombine.low %v664, %v676
    %v698 = vcombine.high %v664, %v676
    %v700 = vunpack.c.l.s4 1983009808
    %v701 = vunpack.c.0.s8 %v700
    %v702 = vlaneseq
    %v703 = vshrl.u32 %v702, 7
    %v704 = vsub.s32 %v701, %v703
    %v705 = vrot.slane %v697, %v704
    %v707 = vunpack.c.l.s4 1983009808
    %v708 = vunpack.c.0.s8 %v707
    %v709 = vlaneseq
    %v710 = vshrl.u32 %v709, 7
    %v711 = vsub.s32 %v708, %v710
    %v712 = vrot.slane %v698, %v711
    %v713 = vcombine.low %v689, %v705
    %v714 = vcombine.high %v689, %v705
    %v716 = vunpack.c.l.s4 1934713408
    %v717 = vunpack.c.0.s8 %v716
    %v718 = vlaneseq
    %v719 = vshrl.u32 %v718, 7
    %v720 = vsub.s32 %v717, %v719
    %v721 = vrot.slane %v713, %v720
    %v723 = vunpack.c.l.s4 1934713408
    %v724 = vunpack.c.0.s8 %v723
    %v725 = vlaneseq
    %v726 = vshrl.u32 %v725, 7
    %v727 = vsub.s32 %v724, %v726
    %v728 = vrot.slane %v714, %v727
    %v729 = vcombine.low %v696, %v712
    %v730 = vcombine.high %v696, %v712
    %v732 = vunpack.c.l.s4 1934713408
    %v733 = vunpack.c.0.s8 %v732
    %v734 = vlaneseq
    %v735 = vshrl.u32 %v734, 7
    %v736 = vsub.s32 %v733, %v735
    %v737 = vrot.slane %v729, %v736
    %v739 = vunpack.c.l.s4 1934713408
    %v740 = vunpack.c.0.s8 %v739
    %v741 = vlaneseq
    %v742 = vshrl.u32 %v741, 7
    %v743 = vsub.s32 %v740, %v742
    %v744 = vrot.slane %v730, %v743
    %v745 = vcombine.high %v721, 0.0
    %v746 = vcombine.high %v728, 0.0
    %v747 = vcombine.high %v737, 0.0
    %v748 = vcombine.high %v744, 0.0
    %v749 = vcombine.low %v276, %v672
    %v750 = vcombine.high %v276, %v672
    %v752 = vunpack.c.l.s4 1983009808
    %v753 = vunpack.c.0.s8 %v752
    %v754 = vlaneseq
    %v755 = vshrl.u32 %v754, 7
    %v756 = vsub.s32 %v753, %v755
    %v757 = vrot.slane %v749, %v756
    %v759 = vunpack.c.l.s4 1983009808
    %v760 = vunpack.c.0.s8 %v759
    %v761 = vlaneseq
    %v762 = vshrl.u32 %v761, 7
    %v763 = vsub.s32 %v760, %v762
    %v764 = vrot.slane %v750, %v763
    %v765 = vcombine.low %v666, %v678
    %v766 = vcombine.high %v666, %v678
    %v768 = vunpack.c.l.s4 1983009808
    %v769 = vunpack.c.0.s8 %v768
    %v770 = vlaneseq
    %v771 = vshrl.u32 %v770, 7
    %v772 = vsub.s32 %v769, %v771
    %v773 = vrot.slane %v765, %v772
    %v775 = vunpack.c.l.s4 1983009808
    %v776 = vunpack.c.0.s8 %v775
    %v777 = vlaneseq
    %v778 = vshrl.u32 %v777, 7
    %v779 = vsub.s32 %v776, %v778
    %v780 = vrot.slane %v766, %v779
    %v781 = vcombine.low %v757, %v773
    %v782 = vcombine.high %v757, %v773
    %v784 = vunpack.c.l.s4 1934713408
    %v785 = vunpack.c.0.s8 %v784
    %v786 = vlaneseq
    %v787 = vshrl.u32 %v786, 7
    %v788 = vsub.s32 %v785, %v787
    %v789 = vrot.slane %v781, %v788
    %v791 = vunpack.c.l.s4 1934713408
    %v792 = vunpack.c.0.s8 %v791
    %v793 = vlaneseq
    %v794 = vshrl.u32 %v793, 7
    %v795 = vsub.s32 %v792, %v794
    %v796 = vrot.slane %v782, %v795
    %v797 = vcombine.low %v764, %v780
    %v798 = vcombine.high %v764, %v780
    %v800 = vunpack.c.l.s4 1934713408
    %v801 = vunpack.c.0.s8 %v800
    %v802 = vlaneseq
    %v803 = vshrl.u32 %v802, 7
    %v804 = vsub.s32 %v801, %v803
    %v805 = vrot.slane %v797, %v804
    %v807 = vunpack.c.l.s4 1934713408
    %v808 = vunpack.c.0.s8 %v807
    %v809 = vlaneseq
    %v810 = vshrl.u32 %v809, 7
    %v811 = vsub.s32 %v808, %v810
    %v812 = vrot.slane %v798, %v811
    %v813 = vcombine.high %v789, 0.0
    %v814 = vcombine.high %v796, 0.0
    %v815 = vcombine.high %v805, 0.0
    %v816 = vcombine.high %v812, 0.0
    %v817 = vcombine.low %v721, %v728
    %v819 = vunpack.c.l.s4 1983009808
    %v820 = vunpack.c.0.s8 %v819
    %v821 = vlaneseq
    %v822 = vshrl.u32 %v821, 7
    %v823 = vsub.s32 %v820, %v822
    %v824 = vrot.slane %v817, %v823
    %v825 = vcombine.low %v745, %v746
    %v827 = vunpack.c.l.s4 1983009808
    %v828 = vunpack.c.0.s8 %v827
    %v829 = vlaneseq
    %v830 = vshrl.u32 %v829, 7
    %v831 = vsub.s32 %v828, %v830
    %v832 = vrot.slane %v825, %v831
    %v833 = vcombine.low %v737, %v744
    %v835 = vunpack.c.l.s4 1983009808
    %v836 = vunpack.c.0.s8 %v835
    %v837 = vlaneseq
    %v838 = vshrl.u32 %v837, 7
    %v839 = vsub.s32 %v836, %v838
    %v840 = vrot.slane %v833, %v839
    %v841 = vcombine.low %v747, %v748
    %v843 = vunpack.c.l.s4 1983009808
    %v844 = vunpack.c.0.s8 %v843
    %v845 = vlaneseq
    %v846 = vshrl.u32 %v845, 7
    %v847 = vsub.s32 %v844, %v846
    %v848 = vrot.slane %v841, %v847
    %v849 = vcombine.low %v824, %v832
    %v850 = vcombine.high %v824, %v832
    %v852 = vunpack.c.l.s4 1934713408
    %v853 = vunpack.c.0.s8 %v852
    %v854 = vlaneseq
    %v855 = vshrl.u32 %v854, 7
    %v856 = vsub.s32 %v853, %v855
    %v857 = vrot.slane %v849, %v856
    %v859 = vunpack.c.l.s4 1934713408
    %v860 = vunpack.c.0.s8 %v859
    %v861 = vlaneseq
    %v862 = vshrl.u32 %v861, 7
    %v863 = vsub.s32 %v860, %v862
    %v864 = vrot.slane %v850, %v863
    %v865 = vcombine.low %v840, %v848
    %v866 = vcombine.high %v840, %v848
    %v868 = vunpack.c.l.s4 1934713408
    %v869 = vunpack.c.0.s8 %v868
    %v870 = vlaneseq
    %v871 = vshrl.u32 %v870, 7
    %v872 = vsub.s32 %v869, %v871
    %v873 = vrot.slane %v865, %v872
    %v875 = vunpack.c.l.s4 1934713408
    %v876 = vunpack.c.0.s8 %v875
    %v877 = vlaneseq
    %v878 = vshrl.u32 %v877, 7
    %v879 = vsub.s32 %v876, %v878
    %v880 = vrot.slane %v866, %v879
    %v881 = vcombine.low %v857, %v873
    %v882 = vcombine.high %v857, %v873
    %v883 = vcombine.low %v864, %v880
    %v884 = vcombine.high %v864, %v880
    %v885 = vcombine.low %v789, %v796
    %v887 = vunpack.c.l.s4 1983009808
    %v888 = vunpack.c.0.s8 %v887
    %v889 = vlaneseq
    %v890 = vshrl.u32 %v889, 7
    %v891 = vsub.s32 %v888, %v890
    %v892 = vrot.slane %v885, %v891
    %v893 = vcombine.low %v813, %v814
    %v895 = vunpack.c.l.s4 1983009808
    %v896 = vunpack.c.0.s8 %v895
    %v897 = vlaneseq
    %v898 = vshrl.u32 %v897, 7
    %v899 = vsub.s32 %v896, %v898
    %v900 = vrot.slane %v893, %v899
    %v901 = vcombine.low %v805, %v812
    %v903 = vunpack.c.l.s4 1983009808
    %v904 = vunpack.c.0.s8 %v903
    %v905 = vlaneseq
    %v906 = vshrl.u32 %v905, 7
    %v907 = vsub.s32 %v904, %v906
    %v908 = vrot.slane %v901, %v907
    %v909 = vcombine.low %v815, %v816
    %v911 = vunpack.c.l.s4 1983009808
    %v912 = vunpack.c.0.s8 %v911
    %v913 = vlaneseq
    %v914 = vshrl.u32 %v913, 7
    %v915 = vsub.s32 %v912, %v914
    %v916 = vrot.slane %v909, %v915
    %v917 = vcombine.low %v892, %v900
    %v918 = vcombine.high %v892, %v900
    %v920 = vunpack.c.l.s4 1934713408
    %v921 = vunpack.c.0.s8 %v920
    %v922 = vlaneseq
    %v923 = vshrl.u32 %v922, 7
    %v924 = vsub.s32 %v921, %v923
    %v925 = vrot.slane %v917, %v924
    %v927 = vunpack.c.l.s4 1934713408
    %v928 = vunpack.c.0.s8 %v927
    %v929 = vlaneseq
    %v930 = vshrl.u32 %v929, 7
    %v931 = vsub.s32 %v928, %v930
    %v932 = vrot.slane %v918, %v931
    %v933 = vcombine.low %v908, %v916
    %v934 = vcombine.high %v908, %v916
    %v936 = vunpack.c.l.s4 1934713408
    %v937 = vunpack.c.0.s8 %v936
    %v938 = vlaneseq
    %v939 = vshrl.u32 %v938, 7
    %v940 = vsub.s32 %v937, %v939
    %v941 = vrot.slane %v933, %v940
    %v943 = vunpack.c.l.s4 1934713408
    %v944 = vunpack.c.0.s8 %v943
    %v945 = vlaneseq
    %v946 = vshrl.u32 %v945, 7
    %v947 = vsub.s32 %v944, %v946
    %v948 = vrot.slane %v934, %v947
    %v949 = vcombine.low %v925, %v941
    %v950 = vcombine.high %v925, %v941
    %v951 = vcombine.low %v932, %v948
    %v952 = vcombine.high %v932, %v948
    %955 = vrot.lane.b32.xlu0 %v361, 120
    %v956 = vpop.permute.xlu0 %955
    %957 = vrot.lane.b32.xlu0 %v366, 120
    %v958 = vpop.permute.xlu0 %957
    %961 = vrot.lane.b32.xlu0 %v361, 112
    %v962 = vpop.permute.xlu0 %961
    %963 = vrot.lane.b32.xlu0 %v366, 112
    %v964 = vpop.permute.xlu0 %963
    %967 = vrot.lane.b32.xlu0 %v361, 104
    %v968 = vpop.permute.xlu0 %967
    %969 = vrot.lane.b32.xlu0 %v366, 104
    %v970 = vpop.permute.xlu0 %969
    %v973 = vcombine.low %v361, %v962
    %v974 = vcombine.high %v361, %v962
    %v976 = vunpack.c.l.s4 1983009808
    %v977 = vunpack.c.0.s8 %v976
    %v978 = vlaneseq
    %v979 = vshrl.u32 %v978, 7
    %v980 = vsub.s32 %v977, %v979
    %v981 = vrot.slane %v973, %v980
    %v983 = vunpack.c.l.s4 1983009808
    %v984 = vunpack.c.0.s8 %v983
    %v985 = vlaneseq
    %v986 = vshrl.u32 %v985, 7
    %v987 = vsub.s32 %v984, %v986
    %v988 = vrot.slane %v974, %v987
    %v989 = vcombine.low %v956, %v968
    %v990 = vcombine.high %v956, %v968
    %v992 = vunpack.c.l.s4 1983009808
    %v993 = vunpack.c.0.s8 %v992
    %v994 = vlaneseq
    %v995 = vshrl.u32 %v994, 7
    %v996 = vsub.s32 %v993, %v995
    %v997 = vrot.slane %v989, %v996
    %v999 = vunpack.c.l.s4 1983009808
    %v1000 = vunpack.c.0.s8 %v999
    %v1001 = vlaneseq
    %v1002 = vshrl.u32 %v1001, 7
    %v1003 = vsub.s32 %v1000, %v1002
    %v1004 = vrot.slane %v990, %v1003
    %v1005 = vcombine.low %v981, %v997
    %v1006 = vcombine.high %v981, %v997
    %v1008 = vunpack.c.l.s4 1934713408
    %v1009 = vunpack.c.0.s8 %v1008
    %v1010 = vlaneseq
    %v1011 = vshrl.u32 %v1010, 7
    %v1012 = vsub.s32 %v1009, %v1011
    %v1013 = vrot.slane %v1005, %v1012
    %v1015 = vunpack.c.l.s4 1934713408
    %v1016 = vunpack.c.0.s8 %v1015
    %v1017 = vlaneseq
    %v1018 = vshrl.u32 %v1017, 7
    %v1019 = vsub.s32 %v1016, %v1018
    %v1020 = vrot.slane %v1006, %v1019
    %v1021 = vcombine.low %v988, %v1004
    %v1022 = vcombine.high %v988, %v1004
    %v1024 = vunpack.c.l.s4 1934713408
    %v1025 = vunpack.c.0.s8 %v1024
    %v1026 = vlaneseq
    %v1027 = vshrl.u32 %v1026, 7
    %v1028 = vsub.s32 %v1025, %v1027
    %v1029 = vrot.slane %v1021, %v1028
    %v1031 = vunpack.c.l.s4 1934713408
    %v1032 = vunpack.c.0.s8 %v1031
    %v1033 = vlaneseq
    %v1034 = vshrl.u32 %v1033, 7
    %v1035 = vsub.s32 %v1032, %v1034
    %v1036 = vrot.slane %v1022, %v1035
    %v1037 = vcombine.high %v1013, 0.0
    %v1038 = vcombine.high %v1020, 0.0
    %v1039 = vcombine.high %v1029, 0.0
    %v1040 = vcombine.high %v1036, 0.0
    %v1041 = vcombine.low %v366, %v964
    %v1042 = vcombine.high %v366, %v964
    %v1044 = vunpack.c.l.s4 1983009808
    %v1045 = vunpack.c.0.s8 %v1044
    %v1046 = vlaneseq
    %v1047 = vshrl.u32 %v1046, 7
    %v1048 = vsub.s32 %v1045, %v1047
    %v1049 = vrot.slane %v1041, %v1048
    %v1051 = vunpack.c.l.s4 1983009808
    %v1052 = vunpack.c.0.s8 %v1051
    %v1053 = vlaneseq
    %v1054 = vshrl.u32 %v1053, 7
    %v1055 = vsub.s32 %v1052, %v1054
    %v1056 = vrot.slane %v1042, %v1055
    %v1057 = vcombine.low %v958, %v970
    %v1058 = vcombine.high %v958, %v970
    %v1060 = vunpack.c.l.s4 1983009808
    %v1061 = vunpack.c.0.s8 %v1060
    %v1062 = vlaneseq
    %v1063 = vshrl.u32 %v1062, 7
    %v1064 = vsub.s32 %v1061, %v1063
    %v1065 = vrot.slane %v1057, %v1064
    %v1067 = vunpack.c.l.s4 1983009808
    %v1068 = vunpack.c.0.s8 %v1067
    %v1069 = vlaneseq
    %v1070 = vshrl.u32 %v1069, 7
    %v1071 = vsub.s32 %v1068, %v1070
    %v1072 = vrot.slane %v1058, %v1071
    %v1073 = vcombine.low %v1049, %v1065
    %v1074 = vcombine.high %v1049, %v1065
    %v1076 = vunpack.c.l.s4 1934713408
    %v1077 = vunpack.c.0.s8 %v1076
    %v1078 = vlaneseq
    %v1079 = vshrl.u32 %v1078, 7
    %v1080 = vsub.s32 %v1077, %v1079
    %v1081 = vrot.slane %v1073, %v1080
    %v1083 = vunpack.c.l.s4 1934713408
    %v1084 = vunpack.c.0.s8 %v1083
    %v1085 = vlaneseq
    %v1086 = vshrl.u32 %v1085, 7
    %v1087 = vsub.s32 %v1084, %v1086
    %v1088 = vrot.slane %v1074, %v1087
    %v1089 = vcombine.low %v1056, %v1072
    %v1090 = vcombine.high %v1056, %v1072
    %v1092 = vunpack.c.l.s4 1934713408
    %v1093 = vunpack.c.0.s8 %v1092
    %v1094 = vlaneseq
    %v1095 = vshrl.u32 %v1094, 7
    %v1096 = vsub.s32 %v1093, %v1095
    %v1097 = vrot.slane %v1089, %v1096
    %v1099 = vunpack.c.l.s4 1934713408
    %v1100 = vunpack.c.0.s8 %v1099
    %v1101 = vlaneseq
    %v1102 = vshrl.u32 %v1101, 7
    %v1103 = vsub.s32 %v1100, %v1102
    %v1104 = vrot.slane %v1090, %v1103
    %v1105 = vcombine.high %v1081, 0.0
    %v1106 = vcombine.high %v1088, 0.0
    %v1107 = vcombine.high %v1097, 0.0
    %v1108 = vcombine.high %v1104, 0.0
    %v1109 = vcombine.low %v1013, %v1020
    %v1111 = vunpack.c.l.s4 1983009808
    %v1112 = vunpack.c.0.s8 %v1111
    %v1113 = vlaneseq
    %v1114 = vshrl.u32 %v1113, 7
    %v1115 = vsub.s32 %v1112, %v1114
    %v1116 = vrot.slane %v1109, %v1115
    %v1117 = vcombine.low %v1037, %v1038
    %v1119 = vunpack.c.l.s4 1983009808
    %v1120 = vunpack.c.0.s8 %v1119
    %v1121 = vlaneseq
    %v1122 = vshrl.u32 %v1121, 7
    %v1123 = vsub.s32 %v1120, %v1122
    %v1124 = vrot.slane %v1117, %v1123
    %v1125 = vcombine.low %v1029, %v1036
    %v1127 = vunpack.c.l.s4 1983009808
    %v1128 = vunpack.c.0.s8 %v1127
    %v1129 = vlaneseq
    %v1130 = vshrl.u32 %v1129, 7
    %v1131 = vsub.s32 %v1128, %v1130
    %v1132 = vrot.slane %v1125, %v1131
    %v1133 = vcombine.low %v1039, %v1040
    %v1135 = vunpack.c.l.s4 1983009808
    %v1136 = vunpack.c.0.s8 %v1135
    %v1137 = vlaneseq
    %v1138 = vshrl.u32 %v1137, 7
    %v1139 = vsub.s32 %v1136, %v1138
    %v1140 = vrot.slane %v1133, %v1139
    %v1141 = vcombine.low %v1116, %v1124
    %v1142 = vcombine.high %v1116, %v1124
    %v1144 = vunpack.c.l.s4 1934713408
    %v1145 = vunpack.c.0.s8 %v1144
    %v1146 = vlaneseq
    %v1147 = vshrl.u32 %v1146, 7
    %v1148 = vsub.s32 %v1145, %v1147
    %v1149 = vrot.slane %v1141, %v1148
    %v1151 = vunpack.c.l.s4 1934713408
    %v1152 = vunpack.c.0.s8 %v1151
    %v1153 = vlaneseq
    %v1154 = vshrl.u32 %v1153, 7
    %v1155 = vsub.s32 %v1152, %v1154
    %v1156 = vrot.slane %v1142, %v1155
    %v1157 = vcombine.low %v1132, %v1140
    %v1158 = vcombine.high %v1132, %v1140
    %v1160 = vunpack.c.l.s4 1934713408
    %v1161 = vunpack.c.0.s8 %v1160
    %v1162 = vlaneseq
    %v1163 = vshrl.u32 %v1162, 7
    %v1164 = vsub.s32 %v1161, %v1163
    %v1165 = vrot.slane %v1157, %v1164
    %v1167 = vunpack.c.l.s4 1934713408
    %v1168 = vunpack.c.0.s8 %v1167
    %v1169 = vlaneseq
    %v1170 = vshrl.u32 %v1169, 7
    %v1171 = vsub.s32 %v1168, %v1170
    %v1172 = vrot.slane %v1158, %v1171
    %v1173 = vcombine.low %v1149, %v1165
    %v1174 = vcombine.high %v1149, %v1165
    %v1175 = vcombine.low %v1156, %v1172
    %v1176 = vcombine.high %v1156, %v1172
    %v1177 = vcombine.low %v1081, %v1088
    %v1179 = vunpack.c.l.s4 1983009808
    %v1180 = vunpack.c.0.s8 %v1179
    %v1181 = vlaneseq
    %v1182 = vshrl.u32 %v1181, 7
    %v1183 = vsub.s32 %v1180, %v1182
    %v1184 = vrot.slane %v1177, %v1183
    %v1185 = vcombine.low %v1105, %v1106
    %v1187 = vunpack.c.l.s4 1983009808
    %v1188 = vunpack.c.0.s8 %v1187
    %v1189 = vlaneseq
    %v1190 = vshrl.u32 %v1189, 7
    %v1191 = vsub.s32 %v1188, %v1190
    %v1192 = vrot.slane %v1185, %v1191
    %v1193 = vcombine.low %v1097, %v1104
    %v1195 = vunpack.c.l.s4 1983009808
    %v1196 = vunpack.c.0.s8 %v1195
    %v1197 = vlaneseq
    %v1198 = vshrl.u32 %v1197, 7
    %v1199 = vsub.s32 %v1196, %v1198
    %v1200 = vrot.slane %v1193, %v1199
    %v1201 = vcombine.low %v1107, %v1108
    %v1203 = vunpack.c.l.s4 1983009808
    %v1204 = vunpack.c.0.s8 %v1203
    %v1205 = vlaneseq
    %v1206 = vshrl.u32 %v1205, 7
    %v1207 = vsub.s32 %v1204, %v1206
    %v1208 = vrot.slane %v1201, %v1207
    %v1209 = vcombine.low %v1184, %v1192
    %v1210 = vcombine.high %v1184, %v1192
    %v1212 = vunpack.c.l.s4 1934713408
    %v1213 = vunpack.c.0.s8 %v1212
    %v1214 = vlaneseq
    %v1215 = vshrl.u32 %v1214, 7
    %v1216 = vsub.s32 %v1213, %v1215
    %v1217 = vrot.slane %v1209, %v1216
    %v1219 = vunpack.c.l.s4 1934713408
    %v1220 = vunpack.c.0.s8 %v1219
    %v1221 = vlaneseq
    %v1222 = vshrl.u32 %v1221, 7
    %v1223 = vsub.s32 %v1220, %v1222
    %v1224 = vrot.slane %v1210, %v1223
    %v1225 = vcombine.low %v1200, %v1208
    %v1226 = vcombine.high %v1200, %v1208
    %v1228 = vunpack.c.l.s4 1934713408
    %v1229 = vunpack.c.0.s8 %v1228
    %v1230 = vlaneseq
    %v1231 = vshrl.u32 %v1230, 7
    %v1232 = vsub.s32 %v1229, %v1231
    %v1233 = vrot.slane %v1225, %v1232
    %v1235 = vunpack.c.l.s4 1934713408
    %v1236 = vunpack.c.0.s8 %v1235
    %v1237 = vlaneseq
    %v1238 = vshrl.u32 %v1237, 7
    %v1239 = vsub.s32 %v1236, %v1238
    %v1240 = vrot.slane %v1226, %v1239
    %v1241 = vcombine.low %v1217, %v1233
    %v1242 = vcombine.high %v1217, %v1233
    %v1243 = vcombine.low %v1224, %v1240
    %v1244 = vcombine.high %v1224, %v1240
    %vm1245 = vcmask 64512
    %v1247 = vsel %vm1245, %v589, 0
    %v1250 = vsel %vm1245, %v881, 0
    %1252 = vmatprep.subr.mxu0 0.0
    %1253 = vmatpush1.xpose.msra.mxu0 %v1250
    %1254 = vmatprep.subr.mxu0 0.0
    %1255 = vmatpush1.xpose.msra.mxu0 0.0
    %1256 = vmatprep.subr.mxu0 0.0
    %1257 = vmatpush1.xpose.msra.mxu0 0.0
    %1258 = vmatprep.subr.mxu0 0.0
    %1259 = vmatpush1.xpose.msra.mxu0 0.0
    %1260 = vmatprep.subr.mxu0 0.0
    %1261 = vmatpush1.xpose.msra.mxu0 0.0
    %1262 = vmatprep.subr.mxu0 0.0
    %1263 = vmatpush1.xpose.msra.mxu0 0.0
    %1264 = vmatprep.subr.mxu0 0.0
    %1265 = vmatpush1.xpose.msra.mxu0 0.0
    %1266 = vmatprep.subr.mxu0 0.0
    %1267 = vmatpush1.xpose.msra.mxu0 0.0
    %1268 = vmatprep.subr.mxu0 0.0
    %1269 = vmatpush1.xpose.msra.mxu0 0.0
    %1270 = vmatprep.subr.mxu0 0.0
    %1271 = vmatpush1.xpose.msra.mxu0 0.0
    %1272 = vmatprep.subr.mxu0 0.0
    %1273 = vmatpush1.xpose.msra.mxu0 0.0
    %1274 = vmatprep.subr.mxu0 0.0
    %1275 = vmatpush1.xpose.msra.mxu0 0.0
    %1276 = vmatprep.subr.mxu0 0.0
    %1277 = vmatpush1.xpose.msra.mxu0 0.0
    %1278 = vmatprep.subr.mxu0 0.0
    %1279 = vmatpush1.xpose.msra.mxu0 0.0
    %1280 = vmatprep.subr.mxu0 0.0
    %1281 = vmatpush1.xpose.msra.mxu0 0.0
    %1282 = vmatprep.subr.mxu0 0.0
    %1283 = vmatpush1.xpose.msra.mxu0 0.0
    %1284 = vmatprep.subr.mxu0 0.0
    %1285 = vmatpush1.xpose.msra.mxu0 0.0
    %1286 = vmatprep.subr.mxu0 0.0
    %1287 = vmatpush1.xpose.msra.mxu0 0.0
    %1288 = vmatprep.subr.mxu0 0.0
    %1289 = vmatpush1.xpose.msra.mxu0 0.0
    %1290 = vmatprep.subr.mxu0 0.0
    %1291 = vmatpush1.xpose.msra.mxu0 0.0
    %1292 = vmatprep.subr.mxu0 0.0
    %1293 = vmatpush1.xpose.msra.mxu0 0.0
    %1294 = vmatprep.subr.mxu0 0.0
    %1295 = vmatpush1.xpose.msra.mxu0 0.0
    %1296 = vmatprep.subr.mxu0 0.0
    %1297 = vmatpush1.xpose.msra.mxu0 0.0
    %1298 = vmatprep.subr.mxu0 0.0
    %1299 = vmatpush1.xpose.msra.mxu0 0.0
    %1300 = vmatprep.subr.mxu0 0.0
    %1301 = vmatpush1.xpose.msra.mxu0 0.0
    %1302 = vmatprep.subr.mxu0 0.0
    %1303 = vmatpush1.xpose.msra.mxu0 0.0
    %1304 = vmatprep.subr.mxu0 0.0
    %1305 = vmatpush1.xpose.msra.mxu0 0.0
    %1306 = vmatprep.subr.mxu0 0.0
    %1307 = vmatpush1.xpose.msra.mxu0 0.0
    %1308 = vmatprep.subr.mxu0 0.0
    %1309 = vmatpush1.xpose.msra.mxu0 0.0
    %1310 = vmatprep.subr.mxu0 0.0
    %1311 = vmatpush1.xpose.msra.mxu0 0.0
    %1312 = vmatprep.subr.mxu0 0.0
    %1313 = vmatpush1.xpose.msra.mxu0 0.0
    %1314 = vmatprep.subr.mxu0 0.0
    %1315 = vmatpush1.xpose.msra.mxu0 0.0
    %1316 = vmatprep.mubr.f32.mxu0 0.0
    %1317 = vmatmul.mubr.f32.gmra.mrb[0].mxu0 %v1247
    %v1318 = vpop.f32.mrb[0].mxu0
    %v1319 = vadd.f32 0.0, %v1318
    %v1320 = vpop.f32.mrb[0].mxu0
    %1321 = vdwg.mxu0
    %v1323 = vsel %vm1245, %v590, 0
    %v1326 = vsel %vm1245, %v882, 0
    %1328 = vmatprep.subr.mxu0 0.0
    %1329 = vmatpush1.xpose.msra.mxu0 %v1326
    %1330 = vmatprep.subr.mxu0 0.0
    %1331 = vmatpush1.xpose.msra.mxu0 0.0
    %1332 = vmatprep.subr.mxu0 0.0
    %1333 = vmatpush1.xpose.msra.mxu0 0.0
    %1334 = vmatprep.subr.mxu0 0.0
    %1335 = vmatpush1.xpose.msra.mxu0 0.0
    %1336 = vmatprep.subr.mxu0 0.0
    %1337 = vmatpush1.xpose.msra.mxu0 0.0
    %1338 = vmatprep.subr.mxu0 0.0
    %1339 = vmatpush1.xpose.msra.mxu0 0.0
    %1340 = vmatprep.subr.mxu0 0.0
    %1341 = vmatpush1.xpose.msra.mxu0 0.0
    %1342 = vmatprep.subr.mxu0 0.0
    %1343 = vmatpush1.xpose.msra.mxu0 0.0
    %1344 = vmatprep.subr.mxu0 0.0
    %1345 = vmatpush1.xpose.msra.mxu0 0.0
    %1346 = vmatprep.subr.mxu0 0.0
    %1347 = vmatpush1.xpose.msra.mxu0 0.0
    %1348 = vmatprep.subr.mxu0 0.0
    %1349 = vmatpush1.xpose.msra.mxu0 0.0
    %1350 = vmatprep.subr.mxu0 0.0
    %1351 = vmatpush1.xpose.msra.mxu0 0.0
    %1352 = vmatprep.subr.mxu0 0.0
    %1353 = vmatpush1.xpose.msra.mxu0 0.0
    %1354 = vmatprep.subr.mxu0 0.0
    %1355 = vmatpush1.xpose.msra.mxu0 0.0
    %1356 = vmatprep.subr.mxu0 0.0
    %1357 = vmatpush1.xpose.msra.mxu0 0.0
    %1358 = vmatprep.subr.mxu0 0.0
    %1359 = vmatpush1.xpose.msra.mxu0 0.0
    %1360 = vmatprep.subr.mxu0 0.0
    %1361 = vmatpush1.xpose.msra.mxu0 0.0
    %1362 = vmatprep.subr.mxu0 0.0
    %1363 = vmatpush1.xpose.msra.mxu0 0.0
    %1364 = vmatprep.subr.mxu0 0.0
    %1365 = vmatpush1.xpose.msra.mxu0 0.0
    %1366 = vmatprep.subr.mxu0 0.0
    %1367 = vmatpush1.xpose.msra.mxu0 0.0
    %1368 = vmatprep.subr.mxu0 0.0
    %1369 = vmatpush1.xpose.msra.mxu0 0.0
    %1370 = vmatprep.subr.mxu0 0.0
    %1371 = vmatpush1.xpose.msra.mxu0 0.0
    %1372 = vmatprep.subr.mxu0 0.0
    %1373 = vmatpush1.xpose.msra.mxu0 0.0
    %1374 = vmatprep.subr.mxu0 0.0
    %1375 = vmatpush1.xpose.msra.mxu0 0.0
    %1376 = vmatprep.subr.mxu0 0.0
    %1377 = vmatpush1.xpose.msra.mxu0 0.0
    %1378 = vmatprep.subr.mxu0 0.0
    %1379 = vmatpush1.xpose.msra.mxu0 0.0
    %1380 = vmatprep.subr.mxu0 0.0
    %1381 = vmatpush1.xpose.msra.mxu0 0.0
    %1382 = vmatprep.subr.mxu0 0.0
    %1383 = vmatpush1.xpose.msra.mxu0 0.0
    %1384 = vmatprep.subr.mxu0 0.0
    %1385 = vmatpush1.xpose.msra.mxu0 0.0
    %1386 = vmatprep.subr.mxu0 0.0
    %1387 = vmatpush1.xpose.msra.mxu0 0.0
    %1388 = vmatprep.subr.mxu0 0.0
    %1389 = vmatpush1.xpose.msra.mxu0 0.0
    %1390 = vmatprep.subr.mxu0 0.0
    %1391 = vmatpush1.xpose.msra.mxu0 0.0
    %1392 = vmatprep.mubr.f32.mxu0 0.0
    %1393 = vmatmul.mubr.f32.gmra.mrb[0].mxu0 %v1323
    %v1394 = vpop.f32.mrb[0].mxu0
    %v1395 = vadd.f32 0.0, %v1394
    %v1396 = vpop.f32.mrb[0].mxu0
    %1397 = vdwg.mxu0
    %v1399 = vsel %vm1245, %v591, 0
    %v1402 = vsel %vm1245, %v883, 0
    %1404 = vmatprep.subr.mxu0 0.0
    %1405 = vmatpush1.xpose.msra.mxu0 %v1402
    %1406 = vmatprep.subr.mxu0 0.0
    %1407 = vmatpush1.xpose.msra.mxu0 0.0
    %1408 = vmatprep.subr.mxu0 0.0
    %1409 = vmatpush1.xpose.msra.mxu0 0.0
    %1410 = vmatprep.subr.mxu0 0.0
    %1411 = vmatpush1.xpose.msra.mxu0 0.0
    %1412 = vmatprep.subr.mxu0 0.0
    %1413 = vmatpush1.xpose.msra.mxu0 0.0
    %1414 = vmatprep.subr.mxu0 0.0
    %1415 = vmatpush1.xpose.msra.mxu0 0.0
    %1416 = vmatprep.subr.mxu0 0.0
    %1417 = vmatpush1.xpose.msra.mxu0 0.0
    %1418 = vmatprep.subr.mxu0 0.0
    %1419 = vmatpush1.xpose.msra.mxu0 0.0
    %1420 = vmatprep.subr.mxu0 0.0
    %1421 = vmatpush1.xpose.msra.mxu0 0.0
    %1422 = vmatprep.subr.mxu0 0.0
    %1423 = vmatpush1.xpose.msra.mxu0 0.0
    %1424 = vmatprep.subr.mxu0 0.0
    %1425 = vmatpush1.xpose.msra.mxu0 0.0
    %1426 = vmatprep.subr.mxu0 0.0
    %1427 = vmatpush1.xpose.msra.mxu0 0.0
    %1428 = vmatprep.subr.mxu0 0.0
    %1429 = vmatpush1.xpose.msra.mxu0 0.0
    %1430 = vmatprep.subr.mxu0 0.0
    %1431 = vmatpush1.xpose.msra.mxu0 0.0
    %1432 = vmatprep.subr.mxu0 0.0
    %1433 = vmatpush1.xpose.msra.mxu0 0.0
    %1434 = vmatprep.subr.mxu0 0.0
    %1435 = vmatpush1.xpose.msra.mxu0 0.0
    %1436 = vmatprep.subr.mxu0 0.0
    %1437 = vmatpush1.xpose.msra.mxu0 0.0
    %1438 = vmatprep.subr.mxu0 0.0
    %1439 = vmatpush1.xpose.msra.mxu0 0.0
    %1440 = vmatprep.subr.mxu0 0.0
    %1441 = vmatpush1.xpose.msra.mxu0 0.0
    %1442 = vmatprep.subr.mxu0 0.0
    %1443 = vmatpush1.xpose.msra.mxu0 0.0
    %1444 = vmatprep.subr.mxu0 0.0
    %1445 = vmatpush1.xpose.msra.mxu0 0.0
    %1446 = vmatprep.subr.mxu0 0.0
    %1447 = vmatpush1.xpose.msra.mxu0 0.0
    %1448 = vmatprep.subr.mxu0 0.0
    %1449 = vmatpush1.xpose.msra.mxu0 0.0
    %1450 = vmatprep.subr.mxu0 0.0
    %1451 = vmatpush1.xpose.msra.mxu0 0.0
    %1452 = vmatprep.subr.mxu0 0.0
    %1453 = vmatpush1.xpose.msra.mxu0 0.0
    %1454 = vmatprep.subr.mxu0 0.0
    %1455 = vmatpush1.xpose.msra.mxu0 0.0
    %1456 = vmatprep.subr.mxu0 0.0
    %1457 = vmatpush1.xpose.msra.mxu0 0.0
    %1458 = vmatprep.subr.mxu0 0.0
    %1459 = vmatpush1.xpose.msra.mxu0 0.0
    %1460 = vmatprep.subr.mxu0 0.0
    %1461 = vmatpush1.xpose.msra.mxu0 0.0
    %1462 = vmatprep.subr.mxu0 0.0
    %1463 = vmatpush1.xpose.msra.mxu0 0.0
    %1464 = vmatprep.subr.mxu0 0.0
    %1465 = vmatpush1.xpose.msra.mxu0 0.0
    %1466 = vmatprep.subr.mxu0 0.0
    %1467 = vmatpush1.xpose.msra.mxu0 0.0
    %1468 = vmatprep.mubr.f32.mxu0 0.0
    %1469 = vmatmul.mubr.f32.gmra.mrb[0].mxu0 %v1399
    %v1470 = vpop.f32.mrb[0].mxu0
    %v1471 = vadd.f32 0.0, %v1470
    %v1472 = vpop.f32.mrb[0].mxu0
    %1473 = vdwg.mxu0
    %v1475 = vsel %vm1245, %v592, 0
    %v1478 = vsel %vm1245, %v884, 0
    %1480 = vmatprep.subr.mxu0 0.0
    %1481 = vmatpush1.xpose.msra.mxu0 %v1478
    %1482 = vmatprep.subr.mxu0 0.0
    %1483 = vmatpush1.xpose.msra.mxu0 0.0
    %1484 = vmatprep.subr.mxu0 0.0
    %1485 = vmatpush1.xpose.msra.mxu0 0.0
    %1486 = vmatprep.subr.mxu0 0.0
    %1487 = vmatpush1.xpose.msra.mxu0 0.0
    %1488 = vmatprep.subr.mxu0 0.0
    %1489 = vmatpush1.xpose.msra.mxu0 0.0
    %1490 = vmatprep.subr.mxu0 0.0
    %1491 = vmatpush1.xpose.msra.mxu0 0.0
    %1492 = vmatprep.subr.mxu0 0.0
    %1493 = vmatpush1.xpose.msra.mxu0 0.0
    %1494 = vmatprep.subr.mxu0 0.0
    %1495 = vmatpush1.xpose.msra.mxu0 0.0
    %1496 = vmatprep.subr.mxu0 0.0
    %1497 = vmatpush1.xpose.msra.mxu0 0.0
    %1498 = vmatprep.subr.mxu0 0.0
    %1499 = vmatpush1.xpose.msra.mxu0 0.0
    %1500 = vmatprep.subr.mxu0 0.0
    %1501 = vmatpush1.xpose.msra.mxu0 0.0
    %1502 = vmatprep.subr.mxu0 0.0
    %1503 = vmatpush1.xpose.msra.mxu0 0.0
    %1504 = vmatprep.subr.mxu0 0.0
    %1505 = vmatpush1.xpose.msra.mxu0 0.0
    %1506 = vmatprep.subr.mxu0 0.0
    %1507 = vmatpush1.xpose.msra.mxu0 0.0
    %1508 = vmatprep.subr.mxu0 0.0
    %1509 = vmatpush1.xpose.msra.mxu0 0.0
    %1510 = vmatprep.subr.mxu0 0.0
    %1511 = vmatpush1.xpose.msra.mxu0 0.0
    %1512 = vmatprep.subr.mxu0 0.0
    %1513 = vmatpush1.xpose.msra.mxu0 0.0
    %1514 = vmatprep.subr.mxu0 0.0
    %1515 = vmatpush1.xpose.msra.mxu0 0.0
    %1516 = vmatprep.subr.mxu0 0.0
    %1517 = vmatpush1.xpose.msra.mxu0 0.0
    %1518 = vmatprep.subr.mxu0 0.0
    %1519 = vmatpush1.xpose.msra.mxu0 0.0
    %1520 = vmatprep.subr.mxu0 0.0
    %1521 = vmatpush1.xpose.msra.mxu0 0.0
    %1522 = vmatprep.subr.mxu0 0.0
    %1523 = vmatpush1.xpose.msra.mxu0 0.0
    %1524 = vmatprep.subr.mxu0 0.0
    %1525 = vmatpush1.xpose.msra.mxu0 0.0
    %1526 = vmatprep.subr.mxu0 0.0
    %1527 = vmatpush1.xpose.msra.mxu0 0.0
    %1528 = vmatprep.subr.mxu0 0.0
    %1529 = vmatpush1.xpose.msra.mxu0 0.0
    %1530 = vmatprep.subr.mxu0 0.0
    %1531 = vmatpush1.xpose.msra.mxu0 0.0
    %1532 = vmatprep.subr.mxu0 0.0
    %1533 = vmatpush1.xpose.msra.mxu0 0.0
    %1534 = vmatprep.subr.mxu0 0.0
    %1535 = vmatpush1.xpose.msra.mxu0 0.0
    %1536 = vmatprep.subr.mxu0 0.0
    %1537 = vmatpush1.xpose.msra.mxu0 0.0
    %1538 = vmatprep.subr.mxu0 0.0
    %1539 = vmatpush1.xpose.msra.mxu0 0.0
    %1540 = vmatprep.subr.mxu0 0.0
    %1541 = vmatpush1.xpose.msra.mxu0 0.0
    %1542 = vmatprep.subr.mxu0 0.0
    %1543 = vmatpush1.xpose.msra.mxu0 0.0
    %1544 = vmatprep.mubr.f32.mxu0 0.0
    %1545 = vmatmul.mubr.f32.gmra.mrb[0].mxu0 %v1475
    %v1546 = vpop.f32.mrb[0].mxu0
    %v1547 = vadd.f32 0.0, %v1546
    %v1548 = vpop.f32.mrb[0].mxu0
    %1549 = vdwg.mxu0
    %v1551 = vsel %vm1245, %v657, 0
    %v1554 = vsel %vm1245, %v949, 0
    %1556 = vmatprep.subr.mxu0 0.0
    %1557 = vmatpush1.xpose.msra.mxu0 %v1554
    %1558 = vmatprep.subr.mxu0 0.0
    %1559 = vmatpush1.xpose.msra.mxu0 0.0
    %1560 = vmatprep.subr.mxu0 0.0
    %1561 = vmatpush1.xpose.msra.mxu0 0.0
    %1562 = vmatprep.subr.mxu0 0.0
    %1563 = vmatpush1.xpose.msra.mxu0 0.0
    %1564 = vmatprep.subr.mxu0 0.0
    %1565 = vmatpush1.xpose.msra.mxu0 0.0
    %1566 = vmatprep.subr.mxu0 0.0
    %1567 = vmatpush1.xpose.msra.mxu0 0.0
    %1568 = vmatprep.subr.mxu0 0.0
    %1569 = vmatpush1.xpose.msra.mxu0 0.0
    %1570 = vmatprep.subr.mxu0 0.0
    %1571 = vmatpush1.xpose.msra.mxu0 0.0
    %1572 = vmatprep.subr.mxu0 0.0
    %1573 = vmatpush1.xpose.msra.mxu0 0.0
    %1574 = vmatprep.subr.mxu0 0.0
    %1575 = vmatpush1.xpose.msra.mxu0 0.0
    %1576 = vmatprep.subr.mxu0 0.0
    %1577 = vmatpush1.xpose.msra.mxu0 0.0
    %1578 = vmatprep.subr.mxu0 0.0
    %1579 = vmatpush1.xpose.msra.mxu0 0.0
    %1580 = vmatprep.subr.mxu0 0.0
    %1581 = vmatpush1.xpose.msra.mxu0 0.0
    %1582 = vmatprep.subr.mxu0 0.0
    %1583 = vmatpush1.xpose.msra.mxu0 0.0
    %1584 = vmatprep.subr.mxu0 0.0
    %1585 = vmatpush1.xpose.msra.mxu0 0.0
    %1586 = vmatprep.subr.mxu0 0.0
    %1587 = vmatpush1.xpose.msra.mxu0 0.0
    %1588 = vmatprep.subr.mxu0 0.0
    %1589 = vmatpush1.xpose.msra.mxu0 0.0
    %1590 = vmatprep.subr.mxu0 0.0
    %1591 = vmatpush1.xpose.msra.mxu0 0.0
    %1592 = vmatprep.subr.mxu0 0.0
    %1593 = vmatpush1.xpose.msra.mxu0 0.0
    %1594 = vmatprep.subr.mxu0 0.0
    %1595 = vmatpush1.xpose.msra.mxu0 0.0
    %1596 = vmatprep.subr.mxu0 0.0
    %1597 = vmatpush1.xpose.msra.mxu0 0.0
    %1598 = vmatprep.subr.mxu0 0.0
    %1599 = vmatpush1.xpose.msra.mxu0 0.0
    %1600 = vmatprep.subr.mxu0 0.0
    %1601 = vmatpush1.xpose.msra.mxu0 0.0
    %1602 = vmatprep.subr.mxu0 0.0
    %1603 = vmatpush1.xpose.msra.mxu0 0.0
    %1604 = vmatprep.subr.mxu0 0.0
    %1605 = vmatpush1.xpose.msra.mxu0 0.0
    %1606 = vmatprep.subr.mxu0 0.0
    %1607 = vmatpush1.xpose.msra.mxu0 0.0
    %1608 = vmatprep.subr.mxu0 0.0
    %1609 = vmatpush1.xpose.msra.mxu0 0.0
    %1610 = vmatprep.subr.mxu0 0.0
    %1611 = vmatpush1.xpose.msra.mxu0 0.0
    %1612 = vmatprep.subr.mxu0 0.0
    %1613 = vmatpush1.xpose.msra.mxu0 0.0
    %1614 = vmatprep.subr.mxu0 0.0
    %1615 = vmatpush1.xpose.msra.mxu0 0.0
    %1616 = vmatprep.subr.mxu0 0.0
    %1617 = vmatpush1.xpose.msra.mxu0 0.0
    %1618 = vmatprep.subr.mxu0 0.0
    %1619 = vmatpush1.xpose.msra.mxu0 0.0
    %1620 = vmatprep.mubr.f32.mxu0 0.0
    %1621 = vmatmul.mubr.f32.gmra.mrb[0].mxu0 %v1551
    %v1622 = vpop.f32.mrb[0].mxu0
    %v1623 = vadd.f32 0.0, %v1622
    %v1624 = vpop.f32.mrb[0].mxu0
    %1625 = vdwg.mxu0
    %v1627 = vsel %vm1245, %v658, 0
    %v1630 = vsel %vm1245, %v950, 0
    %1632 = vmatprep.subr.mxu0 0.0
    %1633 = vmatpush1.xpose.msra.mxu0 %v1630
    %1634 = vmatprep.subr.mxu0 0.0
    %1635 = vmatpush1.xpose.msra.mxu0 0.0
    %1636 = vmatprep.subr.mxu0 0.0
    %1637 = vmatpush1.xpose.msra.mxu0 0.0
    %1638 = vmatprep.subr.mxu0 0.0
    %1639 = vmatpush1.xpose.msra.mxu0 0.0
    %1640 = vmatprep.subr.mxu0 0.0
    %1641 = vmatpush1.xpose.msra.mxu0 0.0
    %1642 = vmatprep.subr.mxu0 0.0
    %1643 = vmatpush1.xpose.msra.mxu0 0.0
    %1644 = vmatprep.subr.mxu0 0.0
    %1645 = vmatpush1.xpose.msra.mxu0 0.0
    %1646 = vmatprep.subr.mxu0 0.0
    %1647 = vmatpush1.xpose.msra.mxu0 0.0
    %1648 = vmatprep.subr.mxu0 0.0
    %1649 = vmatpush1.xpose.msra.mxu0 0.0
    %1650 = vmatprep.subr.mxu0 0.0
    %1651 = vmatpush1.xpose.msra.mxu0 0.0
    %1652 = vmatprep.subr.mxu0 0.0
    %1653 = vmatpush1.xpose.msra.mxu0 0.0
    %1654 = vmatprep.subr.mxu0 0.0
    %1655 = vmatpush1.xpose.msra.mxu0 0.0
    %1656 = vmatprep.subr.mxu0 0.0
    %1657 = vmatpush1.xpose.msra.mxu0 0.0
    %1658 = vmatprep.subr.mxu0 0.0
    %1659 = vmatpush1.xpose.msra.mxu0 0.0
    %1660 = vmatprep.subr.mxu0 0.0
    %1661 = vmatpush1.xpose.msra.mxu0 0.0
    %1662 = vmatprep.subr.mxu0 0.0
    %1663 = vmatpush1.xpose.msra.mxu0 0.0
    %1664 = vmatprep.subr.mxu0 0.0
    %1665 = vmatpush1.xpose.msra.mxu0 0.0
    %1666 = vmatprep.subr.mxu0 0.0
    %1667 = vmatpush1.xpose.msra.mxu0 0.0
    %1668 = vmatprep.subr.mxu0 0.0
    %1669 = vmatpush1.xpose.msra.mxu0 0.0
    %1670 = vmatprep.subr.mxu0 0.0
    %1671 = vmatpush1.xpose.msra.mxu0 0.0
    %1672 = vmatprep.subr.mxu0 0.0
    %1673 = vmatpush1.xpose.msra.mxu0 0.0
    %1674 = vmatprep.subr.mxu0 0.0
    %1675 = vmatpush1.xpose.msra.mxu0 0.0
    %1676 = vmatprep.subr.mxu0 0.0
    %1677 = vmatpush1.xpose.msra.mxu0 0.0
    %1678 = vmatprep.subr.mxu0 0.0
    %1679 = vmatpush1.xpose.msra.mxu0 0.0
    %1680 = vmatprep.subr.mxu0 0.0
    %1681 = vmatpush1.xpose.msra.mxu0 0.0
    %1682 = vmatprep.subr.mxu0 0.0
    %1683 = vmatpush1.xpose.msra.mxu0 0.0
    %1684 = vmatprep.subr.mxu0 0.0
    %1685 = vmatpush1.xpose.msra.mxu0 0.0
    %1686 = vmatprep.subr.mxu0 0.0
    %1687 = vmatpush1.xpose.msra.mxu0 0.0
    %1688 = vmatprep.subr.mxu0 0.0
    %1689 = vmatpush1.xpose.msra.mxu0 0.0
    %1690 = vmatprep.subr.mxu0 0.0
    %1691 = vmatpush1.xpose.msra.mxu0 0.0
    %1692 = vmatprep.subr.mxu0 0.0
    %1693 = vmatpush1.xpose.msra.mxu0 0.0
    %1694 = vmatprep.subr.mxu0 0.0
    %1695 = vmatpush1.xpose.msra.mxu0 0.0
    %1696 = vmatprep.mubr.f32.mxu0 0.0
    %1697 = vmatmul.mubr.f32.gmra.mrb[0].mxu0 %v1627
    %v1698 = vpop.f32.mrb[0].mxu0
    %v1699 = vadd.f32 0.0, %v1698
    %v1700 = vpop.f32.mrb[0].mxu0
    %1701 = vdwg.mxu0
    %v1703 = vsel %vm1245, %v659, 0
    %v1706 = vsel %vm1245, %v951, 0
    %1708 = vmatprep.subr.mxu0 0.0
    %1709 = vmatpush1.xpose.msra.mxu0 %v1706
    %1710 = vmatprep.subr.mxu0 0.0
    %1711 = vmatpush1.xpose.msra.mxu0 0.0
    %1712 = vmatprep.subr.mxu0 0.0
    %1713 = vmatpush1.xpose.msra.mxu0 0.0
    %1714 = vmatprep.subr.mxu0 0.0
    %1715 = vmatpush1.xpose.msra.mxu0 0.0
    %1716 = vmatprep.subr.mxu0 0.0
    %1717 = vmatpush1.xpose.msra.mxu0 0.0
    %1718 = vmatprep.subr.mxu0 0.0
    %1719 = vmatpush1.xpose.msra.mxu0 0.0
    %1720 = vmatprep.subr.mxu0 0.0
    %1721 = vmatpush1.xpose.msra.mxu0 0.0
    %1722 = vmatprep.subr.mxu0 0.0
    %1723 = vmatpush1.xpose.msra.mxu0 0.0
    %1724 = vmatprep.subr.mxu0 0.0
    %1725 = vmatpush1.xpose.msra.mxu0 0.0
    %1726 = vmatprep.subr.mxu0 0.0
    %1727 = vmatpush1.xpose.msra.mxu0 0.0
    %1728 = vmatprep.subr.mxu0 0.0
    %1729 = vmatpush1.xpose.msra.mxu0 0.0
    %1730 = vmatprep.subr.mxu0 0.0
    %1731 = vmatpush1.xpose.msra.mxu0 0.0
    %1732 = vmatprep.subr.mxu0 0.0
    %1733 = vmatpush1.xpose.msra.mxu0 0.0
    %1734 = vmatprep.subr.mxu0 0.0
    %1735 = vmatpush1.xpose.msra.mxu0 0.0
    %1736 = vmatprep.subr.mxu0 0.0
    %1737 = vmatpush1.xpose.msra.mxu0 0.0
    %1738 = vmatprep.subr.mxu0 0.0
    %1739 = vmatpush1.xpose.msra.mxu0 0.0
    %1740 = vmatprep.subr.mxu0 0.0
    %1741 = vmatpush1.xpose.msra.mxu0 0.0
    %1742 = vmatprep.subr.mxu0 0.0
    %1743 = vmatpush1.xpose.msra.mxu0 0.0
    %1744 = vmatprep.subr.mxu0 0.0
    %1745 = vmatpush1.xpose.msra.mxu0 0.0
    %1746 = vmatprep.subr.mxu0 0.0
    %1747 = vmatpush1.xpose.msra.mxu0 0.0
    %1748 = vmatprep.subr.mxu0 0.0
    %1749 = vmatpush1.xpose.msra.mxu0 0.0
    %1750 = vmatprep.subr.mxu0 0.0
    %1751 = vmatpush1.xpose.msra.mxu0 0.0
    %1752 = vmatprep.subr.mxu0 0.0
    %1753 = vmatpush1.xpose.msra.mxu0 0.0
    %1754 = vmatprep.subr.mxu0 0.0
    %1755 = vmatpush1.xpose.msra.mxu0 0.0
    %1756 = vmatprep.subr.mxu0 0.0
    %1757 = vmatpush1.xpose.msra.mxu0 0.0
    %1758 = vmatprep.subr.mxu0 0.0
    %1759 = vmatpush1.xpose.msra.mxu0 0.0
    %1760 = vmatprep.subr.mxu0 0.0
    %1761 = vmatpush1.xpose.msra.mxu0 0.0
    %1762 = vmatprep.subr.mxu0 0.0
    %1763 = vmatpush1.xpose.msra.mxu0 0.0
    %1764 = vmatprep.subr.mxu0 0.0
    %1765 = vmatpush1.xpose.msra.mxu0 0.0
    %1766 = vmatprep.subr.mxu0 0.0
    %1767 = vmatpush1.xpose.msra.mxu0 0.0
    %1768 = vmatprep.subr.mxu0 0.0
    %1769 = vmatpush1.xpose.msra.mxu0 0.0
    %1770 = vmatprep.subr.mxu0 0.0
    %1771 = vmatpush1.xpose.msra.mxu0 0.0
    %1772 = vmatprep.mubr.f32.mxu0 0.0
    %1773 = vmatmul.mubr.f32.gmra.mrb[0].mxu0 %v1703
    %v1774 = vpop.f32.mrb[0].mxu0
    %v1775 = vadd.f32 0.0, %v1774
    %v1776 = vpop.f32.mrb[0].mxu0
    %1777 = vdwg.mxu0
    %v1779 = vsel %vm1245, %v660, 0
    %v1782 = vsel %vm1245, %v952, 0
    %1784 = vmatprep.subr.mxu0 0.0
    %1785 = vmatpush1.xpose.msra.mxu0 %v1782
    %1786 = vmatprep.subr.mxu0 0.0
    %1787 = vmatpush1.xpose.msra.mxu0 0.0
    %1788 = vmatprep.subr.mxu0 0.0
    %1789 = vmatpush1.xpose.msra.mxu0 0.0
    %1790 = vmatprep.subr.mxu0 0.0
    %1791 = vmatpush1.xpose.msra.mxu0 0.0
    %1792 = vmatprep.subr.mxu0 0.0
    %1793 = vmatpush1.xpose.msra.mxu0 0.0
    %1794 = vmatprep.subr.mxu0 0.0
    %1795 = vmatpush1.xpose.msra.mxu0 0.0
    %1796 = vmatprep.subr.mxu0 0.0
    %1797 = vmatpush1.xpose.msra.mxu0 0.0
    %1798 = vmatprep.subr.mxu0 0.0
    %1799 = vmatpush1.xpose.msra.mxu0 0.0
    %1800 = vmatprep.subr.mxu0 0.0
    %1801 = vmatpush1.xpose.msra.mxu0 0.0
    %1802 = vmatprep.subr.mxu0 0.0
    %1803 = vmatpush1.xpose.msra.mxu0 0.0
    %1804 = vmatprep.subr.mxu0 0.0
    %1805 = vmatpush1.xpose.msra.mxu0 0.0
    %1806 = vmatprep.subr.mxu0 0.0
    %1807 = vmatpush1.xpose.msra.mxu0 0.0
    %1808 = vmatprep.subr.mxu0 0.0
    %1809 = vmatpush1.xpose.msra.mxu0 0.0
    %1810 = vmatprep.subr.mxu0 0.0
    %1811 = vmatpush1.xpose.msra.mxu0 0.0
    %1812 = vmatprep.subr.mxu0 0.0
    %1813 = vmatpush1.xpose.msra.mxu0 0.0
    %1814 = vmatprep.subr.mxu0 0.0
    %1815 = vmatpush1.xpose.msra.mxu0 0.0
    %1816 = vmatprep.subr.mxu0 0.0
    %1817 = vmatpush1.xpose.msra.mxu0 0.0
    %1818 = vmatprep.subr.mxu0 0.0
    %1819 = vmatpush1.xpose.msra.mxu0 0.0
    %1820 = vmatprep.subr.mxu0 0.0
    %1821 = vmatpush1.xpose.msra.mxu0 0.0
    %1822 = vmatprep.subr.mxu0 0.0
    %1823 = vmatpush1.xpose.msra.mxu0 0.0
    %1824 = vmatprep.subr.mxu0 0.0
    %1825 = vmatpush1.xpose.msra.mxu0 0.0
    %1826 = vmatprep.subr.mxu0 0.0
    %1827 = vmatpush1.xpose.msra.mxu0 0.0
    %1828 = vmatprep.subr.mxu0 0.0
    %1829 = vmatpush1.xpose.msra.mxu0 0.0
    %1830 = vmatprep.subr.mxu0 0.0
    %1831 = vmatpush1.xpose.msra.mxu0 0.0
    %1832 = vmatprep.subr.mxu0 0.0
    %1833 = vmatpush1.xpose.msra.mxu0 0.0
    %1834 = vmatprep.subr.mxu0 0.0
    %1835 = vmatpush1.xpose.msra.mxu0 0.0
    %1836 = vmatprep.subr.mxu0 0.0
    %1837 = vmatpush1.xpose.msra.mxu0 0.0
    %1838 = vmatprep.subr.mxu0 0.0
    %1839 = vmatpush1.xpose.msra.mxu0 0.0
    %1840 = vmatprep.subr.mxu0 0.0
    %1841 = vmatpush1.xpose.msra.mxu0 0.0
    %1842 = vmatprep.subr.mxu0 0.0
    %1843 = vmatpush1.xpose.msra.mxu0 0.0
    %1844 = vmatprep.subr.mxu0 0.0
    %1845 = vmatpush1.xpose.msra.mxu0 0.0
    %1846 = vmatprep.subr.mxu0 0.0
    %1847 = vmatpush1.xpose.msra.mxu0 0.0
    %1848 = vmatprep.mubr.f32.mxu0 0.0
    %1849 = vmatmul.mubr.f32.gmra.mrb[0].mxu0 %v1779
    %v1850 = vpop.f32.mrb[0].mxu0
    %v1851 = vadd.f32 0.0, %v1850
    %v1852 = vpop.f32.mrb[0].mxu0
    %1853 = vdwg.mxu0
    %v1854 = vmul.f32 %v1319, 0.35355338
    %v1855 = vmul.f32 %v1395, 0.35355338
    %v1856 = vmul.f32 %v1471, 0.35355338
    %v1857 = vmul.f32 %v1547, 0.35355338
    %v1858 = vmul.f32 %v1623, 0.35355338
    %v1859 = vmul.f32 %v1699, 0.35355338
    %v1860 = vmul.f32 %v1775, 0.35355338
    %v1861 = vmul.f32 %v1851, 0.35355338
    %v1862 = vmax.f32 %v1854, -30.0
    %v1863 = vmax.f32 %v1855, -30.0
    %v1864 = vmax.f32 %v1856, -30.0
    %v1865 = vmax.f32 %v1857, -30.0
    %v1866 = vmax.f32 %v1858, -30.0
    %v1867 = vmax.f32 %v1859, -30.0
    %v1868 = vmax.f32 %v1860, -30.0
    %v1869 = vmax.f32 %v1861, -30.0
    %v1870 = vmin.f32 %v1862, 30.0
    %v1871 = vmin.f32 %v1863, 30.0
    %v1872 = vmin.f32 %v1864, 30.0
    %v1873 = vmin.f32 %v1865, 30.0
    %v1874 = vmin.f32 %v1866, 30.0
    %v1875 = vmin.f32 %v1867, 30.0
    %v1876 = vmin.f32 %v1868, 30.0
    %v1877 = vmin.f32 %v1869, 30.0
    %v1878 = vadd.f32 %v1870, 1e-05
    %v1879 = vadd.f32 %v1871, 1e-05
    %v1880 = vadd.f32 %v1872, 1e-05
    %v1881 = vadd.f32 %v1873, 1e-05
    %v1882 = vadd.f32 %v1874, 1e-05
    %v1883 = vadd.f32 %v1875, 1e-05
    %v1884 = vadd.f32 %v1876, 1e-05
    %v1885 = vadd.f32 %v1877, 1e-05
    %v1886 = vmul.f32 %v1878, 1.442695
    %v1887 = vpow.pop %v1886
    %v1888 = vmul.f32 %v1879, 1.442695
    %v1889 = vpow.pop %v1888
    %v1890 = vmul.f32 %v1880, 1.442695
    %v1891 = vpow.pop %v1890
    %v1892 = vmul.f32 %v1881, 1.442695
    %v1893 = vpow.pop %v1892
    %v1894 = vmul.f32 %v1882, 1.442695
    %v1895 = vpow.pop %v1894
    %v1896 = vmul.f32 %v1883, 1.442695
    %v1897 = vpow.pop %v1896
    %v1898 = vmul.f32 %v1884, 1.442695
    %v1899 = vpow.pop %v1898
    %v1900 = vmul.f32 %v1885, 1.442695
    %v1901 = vpow.pop %v1900
    %v1902 = vsel %vm1245, %v1887, 0.0
    %1903 = vadd.xlane.f32.xlu0 %v1902
    %v1904 = vpop.xlane.xlu0 %1903
    %v1905 = vsel %vm1245, %v1889, 0.0
    %1906 = vadd.xlane.f32.xlu0 %v1905
    %v1907 = vpop.xlane.xlu0 %1906
    %v1908 = vsel %vm1245, %v1891, 0.0
    %1909 = vadd.xlane.f32.xlu0 %v1908
    %v1910 = vpop.xlane.xlu0 %1909
    %v1911 = vsel %vm1245, %v1893, 0.0
    %1912 = vadd.xlane.f32.xlu0 %v1911
    %v1913 = vpop.xlane.xlu0 %1912
    %v1914 = vsel %vm1245, %v1895, 0.0
    %1915 = vadd.xlane.f32.xlu0 %v1914
    %v1916 = vpop.xlane.xlu0 %1915
    %v1917 = vsel %vm1245, %v1897, 0.0
    %1918 = vadd.xlane.f32.xlu0 %v1917
    %v1919 = vpop.xlane.xlu0 %1918
    %v1920 = vsel %vm1245, %v1899, 0.0
    %1921 = vadd.xlane.f32.xlu0 %v1920
    %v1922 = vpop.xlane.xlu0 %1921
    %v1923 = vsel %vm1245, %v1901, 0.0
    %1924 = vadd.xlane.f32.xlu0 %v1923
    %v1925 = vpop.xlane.xlu0 %1924
    %v1926 = vrcp.pop %v1904
    %v1927 = vrcp.pop %v1907
    %v1928 = vrcp.pop %v1910
    %v1929 = vrcp.pop %v1913
    %v1930 = vrcp.pop %v1916
    %v1931 = vrcp.pop %v1919
    %v1932 = vrcp.pop %v1922
    %v1933 = vrcp.pop %v1925
    %v1934 = vmul.f32 %v1887, %v1926
    %v1935 = vmul.f32 %v1889, %v1927
    %v1936 = vmul.f32 %v1891, %v1928
    %v1937 = vmul.f32 %v1893, %v1929
    %v1938 = vmul.f32 %v1895, %v1930
    %v1939 = vmul.f32 %v1897, %v1931
    %v1940 = vmul.f32 %v1899, %v1932
    %v1941 = vmul.f32 %v1901, %v1933
    %v1943 = vsel %vm1245, %v1934, 0
    %1945 = vmatprep.subr.mxu0 0.0
    %1946 = vmatpush1.msra.mxu0 %v1173
    %1947 = vmatprep.subr.mxu0 0.0
    %1948 = vmatpush1.msra.mxu0 0.0
    %1949 = vmatprep.subr.mxu0 0.0
    %1950 = vmatpush1.msra.mxu0 0.0
    %1951 = vmatprep.subr.mxu0 0.0
    %1952 = vmatpush1.msra.mxu0 0.0
    %1953 = vmatprep.subr.mxu0 0.0
    %1954 = vmatpush1.msra.mxu0 0.0
    %1955 = vmatprep.subr.mxu0 0.0
    %1956 = vmatpush1.msra.mxu0 0.0
    %1957 = vmatprep.subr.mxu0 0.0
    %1958 = vmatpush1.msra.mxu0 0.0
    %1959 = vmatprep.subr.mxu0 0.0
    %1960 = vmatpush1.msra.mxu0 0.0
    %1961 = vmatprep.subr.mxu0 0.0
    %1962 = vmatpush1.msra.mxu0 0.0
    %1963 = vmatprep.subr.mxu0 0.0
    %1964 = vmatpush1.msra.mxu0 0.0
    %1965 = vmatprep.subr.mxu0 0.0
    %1966 = vmatpush1.msra.mxu0 0.0
    %1967 = vmatprep.subr.mxu0 0.0
    %1968 = vmatpush1.msra.mxu0 0.0
    %1969 = vmatprep.subr.mxu0 0.0
    %1970 = vmatpush1.msra.mxu0 0.0
    %1971 = vmatprep.subr.mxu0 0.0
    %1972 = vmatpush1.msra.mxu0 0.0
    %1973 = vmatprep.subr.mxu0 0.0
    %1974 = vmatpush1.msra.mxu0 0.0
    %1975 = vmatprep.subr.mxu0 0.0
    %1976 = vmatpush1.msra.mxu0 0.0
    %1977 = vmatprep.subr.mxu0 0.0
    %1978 = vmatpush1.msra.mxu0 0.0
    %1979 = vmatprep.subr.mxu0 0.0
    %1980 = vmatpush1.msra.mxu0 0.0
    %1981 = vmatprep.subr.mxu0 0.0
    %1982 = vmatpush1.msra.mxu0 0.0
    %1983 = vmatprep.subr.mxu0 0.0
    %1984 = vmatpush1.msra.mxu0 0.0
    %1985 = vmatprep.subr.mxu0 0.0
    %1986 = vmatpush1.msra.mxu0 0.0
    %1987 = vmatprep.subr.mxu0 0.0
    %1988 = vmatpush1.msra.mxu0 0.0
    %1989 = vmatprep.subr.mxu0 0.0
    %1990 = vmatpush1.msra.mxu0 0.0
    %1991 = vmatprep.subr.mxu0 0.0
    %1992 = vmatpush1.msra.mxu0 0.0
    %1993 = vmatprep.subr.mxu0 0.0
    %1994 = vmatpush1.msra.mxu0 0.0
    %1995 = vmatprep.subr.mxu0 0.0
    %1996 = vmatpush1.msra.mxu0 0.0
    %1997 = vmatprep.subr.mxu0 0.0
    %1998 = vmatpush1.msra.mxu0 0.0
    %1999 = vmatprep.subr.mxu0 0.0
    %2000 = vmatpush1.msra.mxu0 0.0
    %2001 = vmatprep.subr.mxu0 0.0
    %2002 = vmatpush1.msra.mxu0 0.0
    %2003 = vmatprep.subr.mxu0 0.0
    %2004 = vmatpush1.msra.mxu0 0.0
    %2005 = vmatprep.subr.mxu0 0.0
    %2006 = vmatpush1.msra.mxu0 0.0
    %2007 = vmatprep.subr.mxu0 0.0
    %2008 = vmatpush1.msra.mxu0 0.0
    %2009 = vmatprep.mubr.f32.mxu0 0.0
    %2010 = vmatmul.mubr.f32.gmra.mrb[0].mxu0 %v1943
    %v2011 = vpop.f32.mrb[0].mxu0
    %v2012 = vadd.f32 0.0, %v2011
    %v2013 = vpop.f32.mrb[0].mxu0
    %2014 = vdwg.mxu0
    %v2016 = vsel %vm1245, %v1935, 0
    %2018 = vmatprep.subr.mxu0 0.0
    %2019 = vmatpush1.msra.mxu0 %v1174
    %2020 = vmatprep.subr.mxu0 0.0
    %2021 = vmatpush1.msra.mxu0 0.0
    %2022 = vmatprep.subr.mxu0 0.0
    %2023 = vmatpush1.msra.mxu0 0.0
    %2024 = vmatprep.subr.mxu0 0.0
    %2025 = vmatpush1.msra.mxu0 0.0
    %2026 = vmatprep.subr.mxu0 0.0
    %2027 = vmatpush1.msra.mxu0 0.0
    %2028 = vmatprep.subr.mxu0 0.0
    %2029 = vmatpush1.msra.mxu0 0.0
    %2030 = vmatprep.subr.mxu0 0.0
    %2031 = vmatpush1.msra.mxu0 0.0
    %2032 = vmatprep.subr.mxu0 0.0
    %2033 = vmatpush1.msra.mxu0 0.0
    %2034 = vmatprep.subr.mxu0 0.0
    %2035 = vmatpush1.msra.mxu0 0.0
    %2036 = vmatprep.subr.mxu0 0.0
    %2037 = vmatpush1.msra.mxu0 0.0
    %2038 = vmatprep.subr.mxu0 0.0
    %2039 = vmatpush1.msra.mxu0 0.0
    %2040 = vmatprep.subr.mxu0 0.0
    %2041 = vmatpush1.msra.mxu0 0.0
    %2042 = vmatprep.subr.mxu0 0.0
    %2043 = vmatpush1.msra.mxu0 0.0
    %2044 = vmatprep.subr.mxu0 0.0
    %2045 = vmatpush1.msra.mxu0 0.0
    %2046 = vmatprep.subr.mxu0 0.0
    %2047 = vmatpush1.msra.mxu0 0.0
    %2048 = vmatprep.subr.mxu0 0.0
    %2049 = vmatpush1.msra.mxu0 0.0
    %2050 = vmatprep.subr.mxu0 0.0
    %2051 = vmatpush1.msra.mxu0 0.0
    %2052 = vmatprep.subr.mxu0 0.0
    %2053 = vmatpush1.msra.mxu0 0.0
    %2054 = vmatprep.subr.mxu0 0.0
    %2055 = vmatpush1.msra.mxu0 0.0
    %2056 = vmatprep.subr.mxu0 0.0
    %2057 = vmatpush1.msra.mxu0 0.0
    %2058 = vmatprep.subr.mxu0 0.0
    %2059 = vmatpush1.msra.mxu0 0.0
    %2060 = vmatprep.subr.mxu0 0.0
    %2061 = vmatpush1.msra.mxu0 0.0
    %2062 = vmatprep.subr.mxu0 0.0
    %2063 = vmatpush1.msra.mxu0 0.0
    %2064 = vmatprep.subr.mxu0 0.0
    %2065 = vmatpush1.msra.mxu0 0.0
    %2066 = vmatprep.subr.mxu0 0.0
    %2067 = vmatpush1.msra.mxu0 0.0
    %2068 = vmatprep.subr.mxu0 0.0
    %2069 = vmatpush1.msra.mxu0 0.0
    %2070 = vmatprep.subr.mxu0 0.0
    %2071 = vmatpush1.msra.mxu0 0.0
    %2072 = vmatprep.subr.mxu0 0.0
    %2073 = vmatpush1.msra.mxu0 0.0
    %2074 = vmatprep.subr.mxu0 0.0
    %2075 = vmatpush1.msra.mxu0 0.0
    %2076 = vmatprep.subr.mxu0 0.0
    %2077 = vmatpush1.msra.mxu0 0.0
    %2078 = vmatprep.subr.mxu0 0.0
    %2079 = vmatpush1.msra.mxu0 0.0
    %2080 = vmatprep.subr.mxu0 0.0
    %2081 = vmatpush1.msra.mxu0 0.0
    %2082 = vmatprep.mubr.f32.mxu0 0.0
    %2083 = vmatmul.mubr.f32.gmra.mrb[0].mxu0 %v2016
    %v2084 = vpop.f32.mrb[0].mxu0
    %v2085 = vadd.f32 0.0, %v2084
    %v2086 = vpop.f32.mrb[0].mxu0
    %2087 = vdwg.mxu0
    %v2089 = vsel %vm1245, %v1936, 0
    %2091 = vmatprep.subr.mxu0 0.0
    %2092 = vmatpush1.msra.mxu0 %v1175
    %2093 = vmatprep.subr.mxu0 0.0
    %2094 = vmatpush1.msra.mxu0 0.0
    %2095 = vmatprep.subr.mxu0 0.0
    %2096 = vmatpush1.msra.mxu0 0.0
    %2097 = vmatprep.subr.mxu0 0.0
    %2098 = vmatpush1.msra.mxu0 0.0
    %2099 = vmatprep.subr.mxu0 0.0
    %2100 = vmatpush1.msra.mxu0 0.0
    %2101 = vmatprep.subr.mxu0 0.0
    %2102 = vmatpush1.msra.mxu0 0.0
    %2103 = vmatprep.subr.mxu0 0.0
    %2104 = vmatpush1.msra.mxu0 0.0
    %2105 = vmatprep.subr.mxu0 0.0
    %2106 = vmatpush1.msra.mxu0 0.0
    %2107 = vmatprep.subr.mxu0 0.0
    %2108 = vmatpush1.msra.mxu0 0.0
    %2109 = vmatprep.subr.mxu0 0.0
    %2110 = vmatpush1.msra.mxu0 0.0
    %2111 = vmatprep.subr.mxu0 0.0
    %2112 = vmatpush1.msra.mxu0 0.0
    %2113 = vmatprep.subr.mxu0 0.0
    %2114 = vmatpush1.msra.mxu0 0.0
    %2115 = vmatprep.subr.mxu0 0.0
    %2116 = vmatpush1.msra.mxu0 0.0
    %2117 = vmatprep.subr.mxu0 0.0
    %2118 = vmatpush1.msra.mxu0 0.0
    %2119 = vmatprep.subr.mxu0 0.0
    %2120 = vmatpush1.msra.mxu0 0.0
    %2121 = vmatprep.subr.mxu0 0.0
    %2122 = vmatpush1.msra.mxu0 0.0
    %2123 = vmatprep.subr.mxu0 0.0
    %2124 = vmatpush1.msra.mxu0 0.0
    %2125 = vmatprep.subr.mxu0 0.0
    %2126 = vmatpush1.msra.mxu0 0.0
    %2127 = vmatprep.subr.mxu0 0.0
    %2128 = vmatpush1.msra.mxu0 0.0
    %2129 = vmatprep.subr.mxu0 0.0
    %2130 = vmatpush1.msra.mxu0 0.0
    %2131 = vmatprep.subr.mxu0 0.0
    %2132 = vmatpush1.msra.mxu0 0.0
    %2133 = vmatprep.subr.mxu0 0.0
    %2134 = vmatpush1.msra.mxu0 0.0
    %2135 = vmatprep.subr.mxu0 0.0
    %2136 = vmatpush1.msra.mxu0 0.0
    %2137 = vmatprep.subr.mxu0 0.0
    %2138 = vmatpush1.msra.mxu0 0.0
    %2139 = vmatprep.subr.mxu0 0.0
    %2140 = vmatpush1.msra.mxu0 0.0
    %2141 = vmatprep.subr.mxu0 0.0
    %2142 = vmatpush1.msra.mxu0 0.0
    %2143 = vmatprep.subr.mxu0 0.0
    %2144 = vmatpush1.msra.mxu0 0.0
    %2145 = vmatprep.subr.mxu0 0.0
    %2146 = vmatpush1.msra.mxu0 0.0
    %2147 = vmatprep.subr.mxu0 0.0
    %2148 = vmatpush1.msra.mxu0 0.0
    %2149 = vmatprep.subr.mxu0 0.0
    %2150 = vmatpush1.msra.mxu0 0.0
    %2151 = vmatprep.subr.mxu0 0.0
    %2152 = vmatpush1.msra.mxu0 0.0
    %2153 = vmatprep.subr.mxu0 0.0
    %2154 = vmatpush1.msra.mxu0 0.0
    %2155 = vmatprep.mubr.f32.mxu0 0.0
    %2156 = vmatmul.mubr.f32.gmra.mrb[0].mxu0 %v2089
    %v2157 = vpop.f32.mrb[0].mxu0
    %v2158 = vadd.f32 0.0, %v2157
    %v2159 = vpop.f32.mrb[0].mxu0
    %2160 = vdwg.mxu0
    %v2162 = vsel %vm1245, %v1937, 0
    %2164 = vmatprep.subr.mxu0 0.0
    %2165 = vmatpush1.msra.mxu0 %v1176
    %2166 = vmatprep.subr.mxu0 0.0
    %2167 = vmatpush1.msra.mxu0 0.0
    %2168 = vmatprep.subr.mxu0 0.0
    %2169 = vmatpush1.msra.mxu0 0.0
    %2170 = vmatprep.subr.mxu0 0.0
    %2171 = vmatpush1.msra.mxu0 0.0
    %2172 = vmatprep.subr.mxu0 0.0
    %2173 = vmatpush1.msra.mxu0 0.0
    %2174 = vmatprep.subr.mxu0 0.0
    %2175 = vmatpush1.msra.mxu0 0.0
    %2176 = vmatprep.subr.mxu0 0.0
    %2177 = vmatpush1.msra.mxu0 0.0
    %2178 = vmatprep.subr.mxu0 0.0
    %2179 = vmatpush1.msra.mxu0 0.0
    %2180 = vmatprep.subr.mxu0 0.0
    %2181 = vmatpush1.msra.mxu0 0.0
    %2182 = vmatprep.subr.mxu0 0.0
    %2183 = vmatpush1.msra.mxu0 0.0
    %2184 = vmatprep.subr.mxu0 0.0
    %2185 = vmatpush1.msra.mxu0 0.0
    %2186 = vmatprep.subr.mxu0 0.0
    %2187 = vmatpush1.msra.mxu0 0.0
    %2188 = vmatprep.subr.mxu0 0.0
    %2189 = vmatpush1.msra.mxu0 0.0
    %2190 = vmatprep.subr.mxu0 0.0
    %2191 = vmatpush1.msra.mxu0 0.0
    %2192 = vmatprep.subr.mxu0 0.0
    %2193 = vmatpush1.msra.mxu0 0.0
    %2194 = vmatprep.subr.mxu0 0.0
    %2195 = vmatpush1.msra.mxu0 0.0
    %2196 = vmatprep.subr.mxu0 0.0
    %2197 = vmatpush1.msra.mxu0 0.0
    %2198 = vmatprep.subr.mxu0 0.0
    %2199 = vmatpush1.msra.mxu0 0.0
    %2200 = vmatprep.subr.mxu0 0.0
    %2201 = vmatpush1.msra.mxu0 0.0
    %2202 = vmatprep.subr.mxu0 0.0
    %2203 = vmatpush1.msra.mxu0 0.0
    %2204 = vmatprep.subr.mxu0 0.0
    %2205 = vmatpush1.msra.mxu0 0.0
    %2206 = vmatprep.subr.mxu0 0.0
    %2207 = vmatpush1.msra.mxu0 0.0
    %2208 = vmatprep.subr.mxu0 0.0
    %2209 = vmatpush1.msra.mxu0 0.0
    %2210 = vmatprep.subr.mxu0 0.0
    %2211 = vmatpush1.msra.mxu0 0.0
    %2212 = vmatprep.subr.mxu0 0.0
    %2213 = vmatpush1.msra.mxu0 0.0
    %2214 = vmatprep.subr.mxu0 0.0
    %2215 = vmatpush1.msra.mxu0 0.0
    %2216 = vmatprep.subr.mxu0 0.0
    %2217 = vmatpush1.msra.mxu0 0.0
    %2218 = vmatprep.subr.mxu0 0.0
    %2219 = vmatpush1.msra.mxu0 0.0
    %2220 = vmatprep.subr.mxu0 0.0
    %2221 = vmatpush1.msra.mxu0 0.0
    %2222 = vmatprep.subr.mxu0 0.0
    %2223 = vmatpush1.msra.mxu0 0.0
    %2224 = vmatprep.subr.mxu0 0.0
    %2225 = vmatpush1.msra.mxu0 0.0
    %2226 = vmatprep.subr.mxu0 0.0
    %2227 = vmatpush1.msra.mxu0 0.0
    %2228 = vmatprep.mubr.f32.mxu0 0.0
    %2229 = vmatmul.mubr.f32.gmra.mrb[0].mxu0 %v2162
    %v2230 = vpop.f32.mrb[0].mxu0
    %v2231 = vadd.f32 0.0, %v2230
    %v2232 = vpop.f32.mrb[0].mxu0
    %2233 = vdwg.mxu0
    %v2235 = vsel %vm1245, %v1938, 0
    %2237 = vmatprep.subr.mxu0 0.0
    %2238 = vmatpush1.msra.mxu0 %v1241
    %2239 = vmatprep.subr.mxu0 0.0
    %2240 = vmatpush1.msra.mxu0 0.0
    %2241 = vmatprep.subr.mxu0 0.0
    %2242 = vmatpush1.msra.mxu0 0.0
    %2243 = vmatprep.subr.mxu0 0.0
    %2244 = vmatpush1.msra.mxu0 0.0
    %2245 = vmatprep.subr.mxu0 0.0
    %2246 = vmatpush1.msra.mxu0 0.0
    %2247 = vmatprep.subr.mxu0 0.0
    %2248 = vmatpush1.msra.mxu0 0.0
    %2249 = vmatprep.subr.mxu0 0.0
    %2250 = vmatpush1.msra.mxu0 0.0
    %2251 = vmatprep.subr.mxu0 0.0
    %2252 = vmatpush1.msra.mxu0 0.0
    %2253 = vmatprep.subr.mxu0 0.0
    %2254 = vmatpush1.msra.mxu0 0.0
    %2255 = vmatprep.subr.mxu0 0.0
    %2256 = vmatpush1.msra.mxu0 0.0
    %2257 = vmatprep.subr.mxu0 0.0
    %2258 = vmatpush1.msra.mxu0 0.0
    %2259 = vmatprep.subr.mxu0 0.0
    %2260 = vmatpush1.msra.mxu0 0.0
    %2261 = vmatprep.subr.mxu0 0.0
    %2262 = vmatpush1.msra.mxu0 0.0
    %2263 = vmatprep.subr.mxu0 0.0
    %2264 = vmatpush1.msra.mxu0 0.0
    %2265 = vmatprep.subr.mxu0 0.0
    %2266 = vmatpush1.msra.mxu0 0.0
    %2267 = vmatprep.subr.mxu0 0.0
    %2268 = vmatpush1.msra.mxu0 0.0
    %2269 = vmatprep.subr.mxu0 0.0
    %2270 = vmatpush1.msra.mxu0 0.0
    %2271 = vmatprep.subr.mxu0 0.0
    %2272 = vmatpush1.msra.mxu0 0.0
    %2273 = vmatprep.subr.mxu0 0.0
    %2274 = vmatpush1.msra.mxu0 0.0
    %2275 = vmatprep.subr.mxu0 0.0
    %2276 = vmatpush1.msra.mxu0 0.0
    %2277 = vmatprep.subr.mxu0 0.0
    %2278 = vmatpush1.msra.mxu0 0.0
    %2279 = vmatprep.subr.mxu0 0.0
    %2280 = vmatpush1.msra.mxu0 0.0
    %2281 = vmatprep.subr.mxu0 0.0
    %2282 = vmatpush1.msra.mxu0 0.0
    %2283 = vmatprep.subr.mxu0 0.0
    %2284 = vmatpush1.msra.mxu0 0.0
    %2285 = vmatprep.subr.mxu0 0.0
    %2286 = vmatpush1.msra.mxu0 0.0
    %2287 = vmatprep.subr.mxu0 0.0
    %2288 = vmatpush1.msra.mxu0 0.0
    %2289 = vmatprep.subr.mxu0 0.0
    %2290 = vmatpush1.msra.mxu0 0.0
    %2291 = vmatprep.subr.mxu0 0.0
    %2292 = vmatpush1.msra.mxu0 0.0
    %2293 = vmatprep.subr.mxu0 0.0
    %2294 = vmatpush1.msra.mxu0 0.0
    %2295 = vmatprep.subr.mxu0 0.0
    %2296 = vmatpush1.msra.mxu0 0.0
    %2297 = vmatprep.subr.mxu0 0.0
    %2298 = vmatpush1.msra.mxu0 0.0
    %2299 = vmatprep.subr.mxu0 0.0
    %2300 = vmatpush1.msra.mxu0 0.0
    %2301 = vmatprep.mubr.f32.mxu0 0.0
    %2302 = vmatmul.mubr.f32.gmra.mrb[0].mxu0 %v2235
    %v2303 = vpop.f32.mrb[0].mxu0
    %v2304 = vadd.f32 0.0, %v2303
    %v2305 = vpop.f32.mrb[0].mxu0
    %2306 = vdwg.mxu0
    %v2308 = vsel %vm1245, %v1939, 0
    %2310 = vmatprep.subr.mxu0 0.0
    %2311 = vmatpush1.msra.mxu0 %v1242
    %2312 = vmatprep.subr.mxu0 0.0
    %2313 = vmatpush1.msra.mxu0 0.0
    %2314 = vmatprep.subr.mxu0 0.0
    %2315 = vmatpush1.msra.mxu0 0.0
    %2316 = vmatprep.subr.mxu0 0.0
    %2317 = vmatpush1.msra.mxu0 0.0
    %2318 = vmatprep.subr.mxu0 0.0
    %2319 = vmatpush1.msra.mxu0 0.0
    %2320 = vmatprep.subr.mxu0 0.0
    %2321 = vmatpush1.msra.mxu0 0.0
    %2322 = vmatprep.subr.mxu0 0.0
    %2323 = vmatpush1.msra.mxu0 0.0
    %2324 = vmatprep.subr.mxu0 0.0
    %2325 = vmatpush1.msra.mxu0 0.0
    %2326 = vmatprep.subr.mxu0 0.0
    %2327 = vmatpush1.msra.mxu0 0.0
    %2328 = vmatprep.subr.mxu0 0.0
    %2329 = vmatpush1.msra.mxu0 0.0
    %2330 = vmatprep.subr.mxu0 0.0
    %2331 = vmatpush1.msra.mxu0 0.0
    %2332 = vmatprep.subr.mxu0 0.0
    %2333 = vmatpush1.msra.mxu0 0.0
    %2334 = vmatprep.subr.mxu0 0.0
    %2335 = vmatpush1.msra.mxu0 0.0
    %2336 = vmatprep.subr.mxu0 0.0
    %2337 = vmatpush1.msra.mxu0 0.0
    %2338 = vmatprep.subr.mxu0 0.0
    %2339 = vmatpush1.msra.mxu0 0.0
    %2340 = vmatprep.subr.mxu0 0.0
    %2341 = vmatpush1.msra.mxu0 0.0
    %2342 = vmatprep.subr.mxu0 0.0
    %2343 = vmatpush1.msra.mxu0 0.0
    %2344 = vmatprep.subr.mxu0 0.0
    %2345 = vmatpush1.msra.mxu0 0.0
    %2346 = vmatprep.subr.mxu0 0.0
    %2347 = vmatpush1.msra.mxu0 0.0
    %2348 = vmatprep.subr.mxu0 0.0
    %2349 = vmatpush1.msra.mxu0 0.0
    %2350 = vmatprep.subr.mxu0 0.0
    %2351 = vmatpush1.msra.mxu0 0.0
    %2352 = vmatprep.subr.mxu0 0.0
    %2353 = vmatpush1.msra.mxu0 0.0
    %2354 = vmatprep.subr.mxu0 0.0
    %2355 = vmatpush1.msra.mxu0 0.0
    %2356 = vmatprep.subr.mxu0 0.0
    %2357 = vmatpush1.msra.mxu0 0.0
    %2358 = vmatprep.subr.mxu0 0.0
    %2359 = vmatpush1.msra.mxu0 0.0
    %2360 = vmatprep.subr.mxu0 0.0
    %2361 = vmatpush1.msra.mxu0 0.0
    %2362 = vmatprep.subr.mxu0 0.0
    %2363 = vmatpush1.msra.mxu0 0.0
    %2364 = vmatprep.subr.mxu0 0.0
    %2365 = vmatpush1.msra.mxu0 0.0
    %2366 = vmatprep.subr.mxu0 0.0
    %2367 = vmatpush1.msra.mxu0 0.0
    %2368 = vmatprep.subr.mxu0 0.0
    %2369 = vmatpush1.msra.mxu0 0.0
    %2370 = vmatprep.subr.mxu0 0.0
    %2371 = vmatpush1.msra.mxu0 0.0
    %2372 = vmatprep.subr.mxu0 0.0
    %2373 = vmatpush1.msra.mxu0 0.0
    %2374 = vmatprep.mubr.f32.mxu0 0.0
    %2375 = vmatmul.mubr.f32.gmra.mrb[0].mxu0 %v2308
    %v2376 = vpop.f32.mrb[0].mxu0
    %v2377 = vadd.f32 0.0, %v2376
    %v2378 = vpop.f32.mrb[0].mxu0
    %2379 = vdwg.mxu0
    %v2381 = vsel %vm1245, %v1940, 0
    %2383 = vmatprep.subr.mxu0 0.0
    %2384 = vmatpush1.msra.mxu0 %v1243
    %2385 = vmatprep.subr.mxu0 0.0
    %2386 = vmatpush1.msra.mxu0 0.0
    %2387 = vmatprep.subr.mxu0 0.0
    %2388 = vmatpush1.msra.mxu0 0.0
    %2389 = vmatprep.subr.mxu0 0.0
    %2390 = vmatpush1.msra.mxu0 0.0
    %2391 = vmatprep.subr.mxu0 0.0
    %2392 = vmatpush1.msra.mxu0 0.0
    %2393 = vmatprep.subr.mxu0 0.0
    %2394 = vmatpush1.msra.mxu0 0.0
    %2395 = vmatprep.subr.mxu0 0.0
    %2396 = vmatpush1.msra.mxu0 0.0
    %2397 = vmatprep.subr.mxu0 0.0
    %2398 = vmatpush1.msra.mxu0 0.0
    %2399 = vmatprep.subr.mxu0 0.0
    %2400 = vmatpush1.msra.mxu0 0.0
    %2401 = vmatprep.subr.mxu0 0.0
    %2402 = vmatpush1.msra.mxu0 0.0
    %2403 = vmatprep.subr.mxu0 0.0
    %2404 = vmatpush1.msra.mxu0 0.0
    %2405 = vmatprep.subr.mxu0 0.0
    %2406 = vmatpush1.msra.mxu0 0.0
    %2407 = vmatprep.subr.mxu0 0.0
    %2408 = vmatpush1.msra.mxu0 0.0
    %2409 = vmatprep.subr.mxu0 0.0
    %2410 = vmatpush1.msra.mxu0 0.0
    %2411 = vmatprep.subr.mxu0 0.0
    %2412 = vmatpush1.msra.mxu0 0.0
    %2413 = vmatprep.subr.mxu0 0.0
    %2414 = vmatpush1.msra.mxu0 0.0
    %2415 = vmatprep.subr.mxu0 0.0
    %2416 = vmatpush1.msra.mxu0 0.0
    %2417 = vmatprep.subr.mxu0 0.0
    %2418 = vmatpush1.msra.mxu0 0.0
    %2419 = vmatprep.subr.mxu0 0.0
    %2420 = vmatpush1.msra.mxu0 0.0
    %2421 = vmatprep.subr.mxu0 0.0
    %2422 = vmatpush1.msra.mxu0 0.0
    %2423 = vmatprep.subr.mxu0 0.0
    %2424 = vmatpush1.msra.mxu0 0.0
    %2425 = vmatprep.subr.mxu0 0.0
    %2426 = vmatpush1.msra.mxu0 0.0
    %2427 = vmatprep.subr.mxu0 0.0
    %2428 = vmatpush1.msra.mxu0 0.0
    %2429 = vmatprep.subr.mxu0 0.0
    %2430 = vmatpush1.msra.mxu0 0.0
    %2431 = vmatprep.subr.mxu0 0.0
    %2432 = vmatpush1.msra.mxu0 0.0
    %2433 = vmatprep.subr.mxu0 0.0
    %2434 = vmatpush1.msra.mxu0 0.0
    %2435 = vmatprep.subr.mxu0 0.0
    %2436 = vmatpush1.msra.mxu0 0.0
    %2437 = vmatprep.subr.mxu0 0.0
    %2438 = vmatpush1.msra.mxu0 0.0
    %2439 = vmatprep.subr.mxu0 0.0
    %2440 = vmatpush1.msra.mxu0 0.0
    %2441 = vmatprep.subr.mxu0 0.0
    %2442 = vmatpush1.msra.mxu0 0.0
    %2443 = vmatprep.subr.mxu0 0.0
    %2444 = vmatpush1.msra.mxu0 0.0
    %2445 = vmatprep.subr.mxu0 0.0
    %2446 = vmatpush1.msra.mxu0 0.0
    %2447 = vmatprep.mubr.f32.mxu0 0.0
    %2448 = vmatmul.mubr.f32.gmra.mrb[0].mxu0 %v2381
    %v2449 = vpop.f32.mrb[0].mxu0
    %v2450 = vadd.f32 0.0, %v2449
    %v2451 = vpop.f32.mrb[0].mxu0
    %2452 = vdwg.mxu0
    %v2454 = vsel %vm1245, %v1941, 0
    %2456 = vmatprep.subr.mxu0 0.0
    %2457 = vmatpush1.msra.mxu0 %v1244
    %2458 = vmatprep.subr.mxu0 0.0
    %2459 = vmatpush1.msra.mxu0 0.0
    %2460 = vmatprep.subr.mxu0 0.0
    %2461 = vmatpush1.msra.mxu0 0.0
    %2462 = vmatprep.subr.mxu0 0.0
    %2463 = vmatpush1.msra.mxu0 0.0
    %2464 = vmatprep.subr.mxu0 0.0
    %2465 = vmatpush1.msra.mxu0 0.0
    %2466 = vmatprep.subr.mxu0 0.0
    %2467 = vmatpush1.msra.mxu0 0.0
    %2468 = vmatprep.subr.mxu0 0.0
    %2469 = vmatpush1.msra.mxu0 0.0
    %2470 = vmatprep.subr.mxu0 0.0
    %2471 = vmatpush1.msra.mxu0 0.0
    %2472 = vmatprep.subr.mxu0 0.0
    %2473 = vmatpush1.msra.mxu0 0.0
    %2474 = vmatprep.subr.mxu0 0.0
    %2475 = vmatpush1.msra.mxu0 0.0
    %2476 = vmatprep.subr.mxu0 0.0
    %2477 = vmatpush1.msra.mxu0 0.0
    %2478 = vmatprep.subr.mxu0 0.0
    %2479 = vmatpush1.msra.mxu0 0.0
    %2480 = vmatprep.subr.mxu0 0.0
    %2481 = vmatpush1.msra.mxu0 0.0
    %2482 = vmatprep.subr.mxu0 0.0
    %2483 = vmatpush1.msra.mxu0 0.0
    %2484 = vmatprep.subr.mxu0 0.0
    %2485 = vmatpush1.msra.mxu0 0.0
    %2486 = vmatprep.subr.mxu0 0.0
    %2487 = vmatpush1.msra.mxu0 0.0
    %2488 = vmatprep.subr.mxu0 0.0
    %2489 = vmatpush1.msra.mxu0 0.0
    %2490 = vmatprep.subr.mxu0 0.0
    %2491 = vmatpush1.msra.mxu0 0.0
    %2492 = vmatprep.subr.mxu0 0.0
    %2493 = vmatpush1.msra.mxu0 0.0
    %2494 = vmatprep.subr.mxu0 0.0
    %2495 = vmatpush1.msra.mxu0 0.0
    %2496 = vmatprep.subr.mxu0 0.0
    %2497 = vmatpush1.msra.mxu0 0.0
    %2498 = vmatprep.subr.mxu0 0.0
    %2499 = vmatpush1.msra.mxu0 0.0
    %2500 = vmatprep.subr.mxu0 0.0
    %2501 = vmatpush1.msra.mxu0 0.0
    %2502 = vmatprep.subr.mxu0 0.0
    %2503 = vmatpush1.msra.mxu0 0.0
    %2504 = vmatprep.subr.mxu0 0.0
    %2505 = vmatpush1.msra.mxu0 0.0
    %2506 = vmatprep.subr.mxu0 0.0
    %2507 = vmatpush1.msra.mxu0 0.0
    %2508 = vmatprep.subr.mxu0 0.0
    %2509 = vmatpush1.msra.mxu0 0.0
    %2510 = vmatprep.subr.mxu0 0.0
    %2511 = vmatpush1.msra.mxu0 0.0
    %2512 = vmatprep.subr.mxu0 0.0
    %2513 = vmatpush1.msra.mxu0 0.0
    %2514 = vmatprep.subr.mxu0 0.0
    %2515 = vmatpush1.msra.mxu0 0.0
    %2516 = vmatprep.subr.mxu0 0.0
    %2517 = vmatpush1.msra.mxu0 0.0
    %2518 = vmatprep.subr.mxu0 0.0
    %2519 = vmatpush1.msra.mxu0 0.0
    %2520 = vmatprep.mubr.f32.mxu0 0.0
    %2521 = vmatmul.mubr.f32.gmra.mrb[0].mxu0 %v2454
    %v2522 = vpop.f32.mrb[0].mxu0
    %v2523 = vadd.f32 0.0, %v2522
    %v2524 = vpop.f32.mrb[0].mxu0
    %2525 = vdwg.mxu0
    %v2526 = vcombine.low %v2012, %v2158
    %v2527 = vcombine.high %v2012, %v2158
    %v2529 = vunpack.c.l.s4 1983009808
    %v2530 = vunpack.c.0.s8 %v2529
    %v2531 = vlaneseq
    %v2532 = vshrl.u32 %v2531, 7
    %v2533 = vsub.s32 %v2530, %v2532
    %v2534 = vrot.slane %v2526, %v2533
    %v2536 = vunpack.c.l.s4 1983009808
    %v2537 = vunpack.c.0.s8 %v2536
    %v2538 = vlaneseq
    %v2539 = vshrl.u32 %v2538, 7
    %v2540 = vsub.s32 %v2537, %v2539
    %v2541 = vrot.slane %v2527, %v2540
    %v2542 = vcombine.low %v2085, %v2231
    %v2543 = vcombine.high %v2085, %v2231
    %v2545 = vunpack.c.l.s4 1983009808
    %v2546 = vunpack.c.0.s8 %v2545
    %v2547 = vlaneseq
    %v2548 = vshrl.u32 %v2547, 7
    %v2549 = vsub.s32 %v2546, %v2548
    %v2550 = vrot.slane %v2542, %v2549
    %v2552 = vunpack.c.l.s4 1983009808
    %v2553 = vunpack.c.0.s8 %v2552
    %v2554 = vlaneseq
    %v2555 = vshrl.u32 %v2554, 7
    %v2556 = vsub.s32 %v2553, %v2555
    %v2557 = vrot.slane %v2543, %v2556
    %v2558 = vcombine.low %v2534, %v2550
    %v2559 = vcombine.high %v2534, %v2550
    %v2561 = vunpack.c.l.s4 1934713408
    %v2562 = vunpack.c.0.s8 %v2561
    %v2563 = vlaneseq
    %v2564 = vshrl.u32 %v2563, 7
    %v2565 = vsub.s32 %v2562, %v2564
    %v2566 = vrot.slane %v2558, %v2565
    %v2568 = vunpack.c.l.s4 1934713408
    %v2569 = vunpack.c.0.s8 %v2568
    %v2570 = vlaneseq
    %v2571 = vshrl.u32 %v2570, 7
    %v2572 = vsub.s32 %v2569, %v2571
    %v2573 = vrot.slane %v2559, %v2572
    %v2574 = vcombine.low %v2541, %v2557
    %v2575 = vcombine.high %v2541, %v2557
    %v2577 = vunpack.c.l.s4 1934713408
    %v2578 = vunpack.c.0.s8 %v2577
    %v2579 = vlaneseq
    %v2580 = vshrl.u32 %v2579, 7
    %v2581 = vsub.s32 %v2578, %v2580
    %v2582 = vrot.slane %v2574, %v2581
    %v2584 = vunpack.c.l.s4 1934713408
    %v2585 = vunpack.c.0.s8 %v2584
    %v2586 = vlaneseq
    %v2587 = vshrl.u32 %v2586, 7
    %v2588 = vsub.s32 %v2585, %v2587
    %v2589 = vrot.slane %v2575, %v2588
    %v2590 = vcombine.high %v2566, 0.0
    %v2591 = vcombine.high %v2573, 0.0
    %v2592 = vcombine.high %v2582, 0.0
    %v2593 = vcombine.high %v2589, 0.0
    %v2594 = vcombine.low %v2304, %v2450
    %v2595 = vcombine.high %v2304, %v2450
    %v2597 = vunpack.c.l.s4 1983009808
    %v2598 = vunpack.c.0.s8 %v2597
    %v2599 = vlaneseq
    %v2600 = vshrl.u32 %v2599, 7
    %v2601 = vsub.s32 %v2598, %v2600
    %v2602 = vrot.slane %v2594, %v2601
    %v2604 = vunpack.c.l.s4 1983009808
    %v2605 = vunpack.c.0.s8 %v2604
    %v2606 = vlaneseq
    %v2607 = vshrl.u32 %v2606, 7
    %v2608 = vsub.s32 %v2605, %v2607
    %v2609 = vrot.slane %v2595, %v2608
    %v2610 = vcombine.low %v2377, %v2523
    %v2611 = vcombine.high %v2377, %v2523
    %v2613 = vunpack.c.l.s4 1983009808
    %v2614 = vunpack.c.0.s8 %v2613
    %v2615 = vlaneseq
    %v2616 = vshrl.u32 %v2615, 7
    %v2617 = vsub.s32 %v2614, %v2616
    %v2618 = vrot.slane %v2610, %v2617
    %v2620 = vunpack.c.l.s4 1983009808
    %v2621 = vunpack.c.0.s8 %v2620
    %v2622 = vlaneseq
    %v2623 = vshrl.u32 %v2622, 7
    %v2624 = vsub.s32 %v2621, %v2623
    %v2625 = vrot.slane %v2611, %v2624
    %v2626 = vcombine.low %v2602, %v2618
    %v2627 = vcombine.high %v2602, %v2618
    %v2629 = vunpack.c.l.s4 1934713408
    %v2630 = vunpack.c.0.s8 %v2629
    %v2631 = vlaneseq
    %v2632 = vshrl.u32 %v2631, 7
    %v2633 = vsub.s32 %v2630, %v2632
    %v2634 = vrot.slane %v2626, %v2633
    %v2636 = vunpack.c.l.s4 1934713408
    %v2637 = vunpack.c.0.s8 %v2636
    %v2638 = vlaneseq
    %v2639 = vshrl.u32 %v2638, 7
    %v2640 = vsub.s32 %v2637, %v2639
    %v2641 = vrot.slane %v2627, %v2640
    %v2642 = vcombine.low %v2609, %v2625
    %v2643 = vcombine.high %v2609, %v2625
    %v2645 = vunpack.c.l.s4 1934713408
    %v2646 = vunpack.c.0.s8 %v2645
    %v2647 = vlaneseq
    %v2648 = vshrl.u32 %v2647, 7
    %v2649 = vsub.s32 %v2646, %v2648
    %v2650 = vrot.slane %v2642, %v2649
    %v2652 = vunpack.c.l.s4 1934713408
    %v2653 = vunpack.c.0.s8 %v2652
    %v2654 = vlaneseq
    %v2655 = vshrl.u32 %v2654, 7
    %v2656 = vsub.s32 %v2653, %v2655
    %v2657 = vrot.slane %v2643, %v2656
    %v2658 = vcombine.high %v2634, 0.0
    %v2659 = vcombine.high %v2641, 0.0
    %v2660 = vcombine.high %v2650, 0.0
    %v2661 = vcombine.high %v2657, 0.0
    %v2662 = vcombine.low %v2566, %v2573
    %v2664 = vunpack.c.l.s4 1983009808
    %v2665 = vunpack.c.0.s8 %v2664
    %v2666 = vlaneseq
    %v2667 = vshrl.u32 %v2666, 7
    %v2668 = vsub.s32 %v2665, %v2667
    %v2669 = vrot.slane %v2662, %v2668
    %v2670 = vcombine.low %v2590, %v2591
    %v2672 = vunpack.c.l.s4 1983009808
    %v2673 = vunpack.c.0.s8 %v2672
    %v2674 = vlaneseq
    %v2675 = vshrl.u32 %v2674, 7
    %v2676 = vsub.s32 %v2673, %v2675
    %v2677 = vrot.slane %v2670, %v2676
    %v2678 = vcombine.low %v2582, %v2589
    %v2680 = vunpack.c.l.s4 1983009808
    %v2681 = vunpack.c.0.s8 %v2680
    %v2682 = vlaneseq
    %v2683 = vshrl.u32 %v2682, 7
    %v2684 = vsub.s32 %v2681, %v2683
    %v2685 = vrot.slane %v2678, %v2684
    %v2686 = vcombine.low %v2592, %v2593
    %v2688 = vunpack.c.l.s4 1983009808
    %v2689 = vunpack.c.0.s8 %v2688
    %v2690 = vlaneseq
    %v2691 = vshrl.u32 %v2690, 7
    %v2692 = vsub.s32 %v2689, %v2691
    %v2693 = vrot.slane %v2686, %v2692
    %v2694 = vcombine.low %v2669, %v2677
    %v2695 = vcombine.high %v2669, %v2677
    %v2697 = vunpack.c.l.s4 1934713408
    %v2698 = vunpack.c.0.s8 %v2697
    %v2699 = vlaneseq
    %v2700 = vshrl.u32 %v2699, 7
    %v2701 = vsub.s32 %v2698, %v2700
    %v2702 = vrot.slane %v2694, %v2701
    %v2704 = vunpack.c.l.s4 1934713408
    %v2705 = vunpack.c.0.s8 %v2704
    %v2706 = vlaneseq
    %v2707 = vshrl.u32 %v2706, 7
    %v2708 = vsub.s32 %v2705, %v2707
    %v2709 = vrot.slane %v2695, %v2708
    %v2710 = vcombine.low %v2685, %v2693
    %v2711 = vcombine.high %v2685, %v2693
    %v2713 = vunpack.c.l.s4 1934713408
    %v2714 = vunpack.c.0.s8 %v2713
    %v2715 = vlaneseq
    %v2716 = vshrl.u32 %v2715, 7
    %v2717 = vsub.s32 %v2714, %v2716
    %v2718 = vrot.slane %v2710, %v2717
    %v2720 = vunpack.c.l.s4 1934713408
    %v2721 = vunpack.c.0.s8 %v2720
    %v2722 = vlaneseq
    %v2723 = vshrl.u32 %v2722, 7
    %v2724 = vsub.s32 %v2721, %v2723
    %v2725 = vrot.slane %v2711, %v2724
    %v2726 = vcombine.low %v2702, %v2718
    %v2727 = vcombine.high %v2702, %v2718
    %v2728 = vcombine.low %v2709, %v2725
    %v2729 = vcombine.high %v2709, %v2725
    %v2730 = vcombine.low %v2634, %v2641
    %v2732 = vunpack.c.l.s4 1983009808
    %v2733 = vunpack.c.0.s8 %v2732
    %v2734 = vlaneseq
    %v2735 = vshrl.u32 %v2734, 7
    %v2736 = vsub.s32 %v2733, %v2735
    %v2737 = vrot.slane %v2730, %v2736
    %v2738 = vcombine.low %v2658, %v2659
    %v2740 = vunpack.c.l.s4 1983009808
    %v2741 = vunpack.c.0.s8 %v2740
    %v2742 = vlaneseq
    %v2743 = vshrl.u32 %v2742, 7
    %v2744 = vsub.s32 %v2741, %v2743
    %v2745 = vrot.slane %v2738, %v2744
    %v2746 = vcombine.low %v2650, %v2657
    %v2748 = vunpack.c.l.s4 1983009808
    %v2749 = vunpack.c.0.s8 %v2748
    %v2750 = vlaneseq
    %v2751 = vshrl.u32 %v2750, 7
    %v2752 = vsub.s32 %v2749, %v2751
    %v2753 = vrot.slane %v2746, %v2752
    %v2754 = vcombine.low %v2660, %v2661
    %v2756 = vunpack.c.l.s4 1983009808
    %v2757 = vunpack.c.0.s8 %v2756
    %v2758 = vlaneseq
    %v2759 = vshrl.u32 %v2758, 7
    %v2760 = vsub.s32 %v2757, %v2759
    %v2761 = vrot.slane %v2754, %v2760
    %v2762 = vcombine.low %v2737, %v2745
    %v2763 = vcombine.high %v2737, %v2745
    %v2765 = vunpack.c.l.s4 1934713408
    %v2766 = vunpack.c.0.s8 %v2765
    %v2767 = vlaneseq
    %v2768 = vshrl.u32 %v2767, 7
    %v2769 = vsub.s32 %v2766, %v2768
    %v2770 = vrot.slane %v2762, %v2769
    %v2772 = vunpack.c.l.s4 1934713408
    %v2773 = vunpack.c.0.s8 %v2772
    %v2774 = vlaneseq
    %v2775 = vshrl.u32 %v2774, 7
    %v2776 = vsub.s32 %v2773, %v2775
    %v2777 = vrot.slane %v2763, %v2776
    %v2778 = vcombine.low %v2753, %v2761
    %v2779 = vcombine.high %v2753, %v2761
    %v2781 = vunpack.c.l.s4 1934713408
    %v2782 = vunpack.c.0.s8 %v2781
    %v2783 = vlaneseq
    %v2784 = vshrl.u32 %v2783, 7
    %v2785 = vsub.s32 %v2782, %v2784
    %v2786 = vrot.slane %v2778, %v2785
    %v2788 = vunpack.c.l.s4 1934713408
    %v2789 = vunpack.c.0.s8 %v2788
    %v2790 = vlaneseq
    %v2791 = vshrl.u32 %v2790, 7
    %v2792 = vsub.s32 %v2789, %v2791
    %v2793 = vrot.slane %v2779, %v2792
    %v2794 = vcombine.low %v2770, %v2786
    %v2795 = vcombine.high %v2770, %v2786
    %v2796 = vcombine.low %v2777, %v2793
    %v2797 = vcombine.high %v2777, %v2793
    %2800 = vrot.lane.b32.xlu0 %v2727, 8
    %v2801 = vpop.permute.xlu0 %2800
    %2802 = vrot.lane.b32.xlu0 %v2795, 8
    %v2803 = vpop.permute.xlu0 %2802
    %2808 = vrot.lane.b32.xlu0 %v2728, 16
    %v2809 = vpop.permute.xlu0 %2808
    %2810 = vrot.lane.b32.xlu0 %v2796, 16
    %v2811 = vpop.permute.xlu0 %2810
    %2816 = vrot.lane.b32.xlu0 %v2729, 24
    %v2817 = vpop.permute.xlu0 %2816
    %2818 = vrot.lane.b32.xlu0 %v2797, 24
    %v2819 = vpop.permute.xlu0 %2818
    %v2822 = vsel %vm1245, %v2726, %v2801
    %v2823 = vsel %vm1245, %v2794, %v2803
    %vm2824 = vcmask 130048
    %v2825 = vsel %vm2824, %v2822, %v2809
    %v2826 = vsel %vm2824, %v2823, %v2811
    %vm2827 = vcmask 195584
    %v2828 = vsel %vm2827, %v2825, %v2817
    %v2829 = vsel %vm2827, %v2826, %v2819
    %v2830 = vld [vmem:[#allocation10] sm:$0xff]
    %v2831 = vld [vmem:[#allocation10 + $0x8] sm:$0xff]
    %v2832 = vld [vmem:[#allocation10 + $0x10] sm:$0xff]
    %v2833 = vld [vmem:[#allocation10 + $0x18] sm:$0xff]
    %v2834 = vlaneseq
    %v2835 = vshrl.u32 %v2834, 7
    %v2836 = vsub.s32 3, %v2835
    %v2837 = vrot.slane %v98, %v2836
    %v2839 = vsel %vm107, %v2828, 0
    %v2842 = vsel %vm107, %v2829, 0
    %2844 = vmatprep.subr.mxu0 0.0
    %2845 = vmatpush1.msra.mxu0 %v2830
    %2846 = vmatprep.subr.mxu0 0.0
    %2847 = vmatpush1.msra.mxu0 %v2831
    %2848 = vmatprep.subr.mxu0 0.0
    %2849 = vmatpush1.msra.mxu0 %v2832
    %2850 = vmatprep.subr.mxu0 0.0
    %2851 = vmatpush1.msra.mxu0 %v2833
    %2852 = vmatprep.subr.mxu0 0.0
    %2853 = vmatpush1.msra.mxu0 0.0
    %2854 = vmatprep.subr.mxu0 0.0
    %2855 = vmatpush1.msra.mxu0 0.0
    %2856 = vmatprep.subr.mxu0 0.0
    %2857 = vmatpush1.msra.mxu0 0.0
    %2858 = vmatprep.subr.mxu0 0.0
    %2859 = vmatpush1.msra.mxu0 0.0
    %2860 = vmatprep.subr.mxu0 0.0
    %2861 = vmatpush1.msra.mxu0 0.0
    %2862 = vmatprep.subr.mxu0 0.0
    %2863 = vmatpush1.msra.mxu0 0.0
    %2864 = vmatprep.subr.mxu0 0.0
    %2865 = vmatpush1.msra.mxu0 0.0
    %2866 = vmatprep.subr.mxu0 0.0
    %2867 = vmatpush1.msra.mxu0 0.0
    %2868 = vmatprep.subr.mxu0 0.0
    %2869 = vmatpush1.msra.mxu0 0.0
    %2870 = vmatprep.subr.mxu0 0.0
    %2871 = vmatpush1.msra.mxu0 0.0
    %2872 = vmatprep.subr.mxu0 0.0
    %2873 = vmatpush1.msra.mxu0 0.0
    %2874 = vmatprep.subr.mxu0 0.0
    %2875 = vmatpush1.msra.mxu0 0.0
    %2876 = vmatprep.subr.mxu0 0.0
    %2877 = vmatpush1.msra.mxu0 0.0
    %2878 = vmatprep.subr.mxu0 0.0
    %2879 = vmatpush1.msra.mxu0 0.0
    %2880 = vmatprep.subr.mxu0 0.0
    %2881 = vmatpush1.msra.mxu0 0.0
    %2882 = vmatprep.subr.mxu0 0.0
    %2883 = vmatpush1.msra.mxu0 0.0
    %2884 = vmatprep.subr.mxu0 0.0
    %2885 = vmatpush1.msra.mxu0 0.0
    %2886 = vmatprep.subr.mxu0 0.0
    %2887 = vmatpush1.msra.mxu0 0.0
    %2888 = vmatprep.subr.mxu0 0.0
    %2889 = vmatpush1.msra.mxu0 0.0
    %2890 = vmatprep.subr.mxu0 0.0
    %2891 = vmatpush1.msra.mxu0 0.0
    %2892 = vmatprep.subr.mxu0 0.0
    %2893 = vmatpush1.msra.mxu0 0.0
    %2894 = vmatprep.subr.mxu0 0.0
    %2895 = vmatpush1.msra.mxu0 0.0
    %2896 = vmatprep.subr.mxu0 0.0
    %2897 = vmatpush1.msra.mxu0 0.0
    %2898 = vmatprep.subr.mxu0 0.0
    %2899 = vmatpush1.msra.mxu0 0.0
    %2900 = vmatprep.subr.mxu0 0.0
    %2901 = vmatpush1.msra.mxu0 0.0
    %2902 = vmatprep.subr.mxu0 0.0
    %2903 = vmatpush1.msra.mxu0 0.0
    %2904 = vmatprep.subr.mxu0 0.0
    %2905 = vmatpush1.msra.mxu0 0.0
    %2906 = vmatprep.subr.mxu0 0.0
    %2907 = vmatpush1.msra.mxu0 0.0
    %2908 = vmatprep.mubr.f32.mxu0 0.0
    %2909 = vmatmul.mubr.f32.gmra.mrb[0].mxu0 %v2839
    %v2910 = vpop.f32.mrb[0].mxu0
    %v2911 = vadd.f32 %v2837, %v2910
    %v2912 = vpop.f32.mrb[0].mxu0
    %2913 = vmatprep.mubr.f32.mxu0 0.0
    %2914 = vmatmul.mubr.f32.gmra.mrb[0].mxu0 %v2842
    %v2915 = vpop.f32.mrb[0].mxu0
    %v2916 = vadd.f32 %v2837, %v2915
    %v2917 = vpop.f32.mrb[0].mxu0
    %2918 = vdwg.mxu0
    %v2919 = vmax.f32 %v2911, 0.0
    %v2920 = vmax.f32 %v2916, 0.0
    %2921 = vst.msk [vmem:[#allocation11] sm:$0xff] %vm107, %v2919
    %2922 = vst.msk [vmem:[#allocation11 + $0x8] sm:$0xff] %vm107, %v2920
    // Predicated region
    $region46: #{tpu_custom_call.1} parent=1 // pred_check
      _
    $region47: #{tpu_custom_call.1} parent=1 // pred_check_branch
      %2924 = sbr.rel (0) target = $region49
    $region48: #{tpu_custom_call.1} parent=1 // pred_region
      %s2926 = ssub.s32 256, 256
      %2927 = vsyncadd [#allocation4], %s2926
      %s2928 = sshll.u32 [#allocation11], 4
      %s2929 = int_to_ptr.vmem [resolvable:$true] %s2928
      %2934 = dma.vmem_to_hbm [thread:$0]  %s2929, 256, %s6, [#allocation4], 128, 128, 8
    $region49: #{tpu_custom_call.1} parent=1 // pred_fallthru
      _
    // Predicated region
    $region50: #{tpu_custom_call.1} parent=1 // pred_check
      _
    $region51: #{tpu_custom_call.1} parent=1 // pred_check_branch
      %2936 = sbr.rel (0) target = $region53
    $region52: #{tpu_custom_call.1} parent=1 // pred_region
      %2937 = dma.done [#allocation4], 256
    $region53: #{tpu_custom_call.1} parent=1 // pred_fallthru
      _
    %2938 = vsyncpa [#allocation3], 1
    %2939 = vsyncpa [#allocation6], 1
    %2940 = vsyncpa [#allocation9], 1
    %2941 = vsyncpa [#allocation4], 1

</llo_original>
